<compile_context>
chip_gen: v7x
topology: tpu7x:2x2x1
jax: 0.10.0
libtpu: 0.0.40
codegen_flags: <defaults>
</compile_context>

<pallas_src>
import math

import jax
import jax.numpy as jnp
import numpy as np
from jax import lax
from jax.experimental import pallas as pl
from jax.experimental.pallas import tpu as pltpu


def _layer_norm(v, w, b, eps=1e-5):
    # v: (M, D) fp32, w/b: (1, D) fp32
    mu = jnp.mean(v, axis=-1, keepdims=True)
    var = jnp.mean(jnp.square(v - mu), axis=-1, keepdims=True)
    return (v - mu) * lax.rsqrt(var + eps) * w + b


def _mlp_chunk_rows(n, target=512):
    """Largest multiple-of-8 divisor of n that is <= target (else n: no chunking)."""
    if n <= target:
        return n
    c = (target // 8) * 8
    while c >= 8:
        if n % c == 0:
            return c
        c -= 8
    return n


def _default_batch_block(batch):
    """nb=1 on single-TC chips (v5e/v6e); split the batch in two on v7x (2 TCs)."""
    kind = ""
    try:
        kind = jax.devices()[0].device_kind.lower()
    except Exception:
        pass
    if "v7" in kind and batch % 2 == 0:
        return batch // 2
    return batch


def _make_kernel(bb, S, D, n_heads, n_layers, E_pad):
    Dh = D // n_heads
    N = bb * S
    chunk_rows = _mlp_chunk_rows(N)
    n_chunks = N // chunk_rows
    f32, bf16 = jnp.float32, jnp.bfloat16

    def kernel(x_ref, eot_ref, mask_ref,
               ln1_w_ref, ln1_b_ref, in_w_ref, in_b_ref, out_w_ref, out_b_ref,
               ln2_w_ref, ln2_b_ref, fc_w_ref, fc_b_ref, pj_w_ref, pj_b_ref,
               lnf_w_ref, lnf_b_ref, proj_ref,
               o_ref, x_scr):
        l = pl.program_id(1)

        # ---- first layer of this batch block: load (x + pos) into the residual scratch
        @pl.when(l == 0)
        def _init():
            x_scr[...] = x_ref[...].astype(f32).reshape(N, D)

        def linear(v, w_ref2, b_ref2):
            # bf16 operands on the MXU, fp32 accumulation; w is (in, out) bf16.
            return (jnp.dot(v.astype(bf16), w_ref2[...],
                            preferred_element_type=f32) + b_ref2[...])

        # ---- residual attention block: x = x + MHA(ln_1(x)) ----
        x = x_scr[...]                                    # (N, D) fp32 residual stream
        h = _layer_norm(x, ln1_w_ref[...], ln1_b_ref[...])
        # q-columns of in_w/in_b are pre-scaled by 1/sqrt(Dh) on the host.
        qkv = linear(h, in_w_ref, in_b_ref).astype(bf16)  # (N, 3D)
        mask = mask_ref[...]                              # (S, S) fp32 causal mask
        outs = []
        for hh in range(n_heads):
            sl = slice(hh * Dh, (hh + 1) * Dh)
            q = qkv[:, sl].reshape(bb, S, Dh)
            k = qkv[:, D + hh * Dh:D + (hh + 1) * Dh].reshape(bb, S, Dh)
            v = qkv[:, 2 * D + hh * Dh:2 * D + (hh + 1) * Dh].reshape(bb, S, Dh)
            s = jnp.einsum('bqd,bkd->bqk', q, k,
                           preferred_element_type=f32) + mask      # (bb, S, S) fp32
            m = jnp.max(s, axis=-1, keepdims=True)
            e = jnp.exp(s - m)
            p = e * pl.reciprocal(jnp.sum(e, axis=-1, keepdims=True), approx=True)
            o = jnp.einsum('bqk,bkd->bqd', p.astype(bf16), v,
                           preferred_element_type=f32)
            outs.append(o.reshape(N, Dh))
        # single lane-dense (N, D) attention output, fed straight into out_proj
        attn = outs[0] if n_heads == 1 else jnp.concatenate(outs, axis=-1)
        x_scr[...] = x + linear(attn, out_w_ref, out_b_ref)

        # ---- residual MLP block with QuickGELU, row-chunked to bound fp32 temps ----
        def mlp_update(rows):
            xc = x_scr[rows, :]
            h2 = _layer_norm(xc, ln2_w_ref[...], ln2_b_ref[...])
            h2 = linear(h2, fc_w_ref, fc_b_ref)                    # (rows, 4D) fp32
            h2 = h2 * jax.nn.sigmoid(1.702 * h2)                   # QuickGELU (fp32)
            x_scr[rows, :] = xc + linear(h2, pj_w_ref, pj_b_ref)

        if n_chunks == 1:
            mlp_update(slice(None))
        else:
            @pl.loop(0, n_chunks)
            def _mlp(c):
                start = pl.multiple_of(c * chunk_rows, 8)
                mlp_update(pl.ds(start, chunk_rows))

        # ---- last layer: EOT gather -> ln_final -> text_projection (lane-dense out) --
        @pl.when(l == n_layers - 1)
        def _tail():
            xf = x_scr[...].reshape(bb, S, D)
            sel = jnp.sum(xf * eot_ref[...], axis=1)               # (bb, D) EOT gather
            sel = _layer_norm(sel, lnf_w_ref[...], lnf_b_ref[...])
            out = jnp.dot(sel.astype(bf16), proj_ref[...],
                          preferred_element_type=f32)              # (bb, E_pad)
            o_ref[...] = out.reshape(bb, 1, E_pad)

    return kernel


def text_encoder(x, tok, params, n_heads, batch_block=None):
    B, S, D = x.shape
    L = params['in_w'].shape[0]
    E = params['proj'].shape[1]
    assert D % n_heads == 0
    Dh = D // n_heads
    bb = _default_batch_block(B) if batch_block is None else batch_block
    assert B % bb == 0
    nb = B // bb
    N = bb * S
    E_pad = ((E + 127) // 128) * 128                      # lane-dense output width

    f32, bf16 = jnp.float32, jnp.bfloat16
    # ---- host-side prep (all one-time XLA work) --------------------------------
    # x = x + positional_embedding, fed to the kernel as bf16 (halves resident block).
    x_in = (x + params['pos'][None]).astype(bf16)
    # EOT selection one-hot over the sequence dim (argmax of tokenized prompts).
    eot_onehot = jax.nn.one_hot(jnp.argmax(tok, axis=-1), S,
                                dtype=f32)[..., None]     # (B, S, 1)
    # Causal mask (CLIP build_attention_mask): 0 on/below diagonal, -inf above.
    causal = jnp.where(jnp.tril(jnp.ones((S, S), bool)), 0.0, -jnp.inf).astype(f32)

    # Linear weights: transpose to (in, out), cast to bf16 (halves DMA + VMEM);
    # fold the 1/sqrt(Dh) attention scale into the q columns of in_proj.
    wT = lambda w: jnp.swapaxes(w, -1, -2)
    vec = lambda v, n: v.reshape(L, 1, n).astype(f32)
    qscale = jnp.concatenate([jnp.full((D,), 1.0 / math.sqrt(Dh), f32),
                              jnp.ones((2 * D,), f32)])
    in_w = (wT(params['in_w']) * qscale).astype(bf16)     # (L, D, 3D)
    in_b = (params['in_b'] * qscale).reshape(L, 1, 3 * D).astype(f32)
    out_w = wT(params['out_w']).astype(bf16)              # (L, D, D)
    fc_w = wT(params['fc_w']).astype(bf16)                # (L, D, 4D)
    pj_w = wT(params['pj_w']).astype(bf16)                # (L, 4D, D)
    out_b, fc_b, pj_b = vec(params['out_b'], D), vec(params['fc_b'], 4 * D), vec(params['pj_b'], D)
    ln1_w, ln1_b = vec(params['ln1_w'], D), vec(params['ln1_b'], D)
    ln2_w, ln2_b = vec(params['ln2_w'], D), vec(params['ln2_b'], D)
    lnf_w = params['lnf_w'].reshape(1, D).astype(f32)
    lnf_b = params['lnf_b'].reshape(1, D).astype(f32)
    proj = jnp.pad(params['proj'], ((0, 0), (0, E_pad - E))).astype(bf16)

    # ---- BlockSpecs: per-layer tensors stream one layer per grid step -----------
    def lw_spec(s1, s2):
        return pl.BlockSpec((None, s1, s2), lambda b, l: (l, 0, 0))

    def lv_spec(s1):
        return pl.BlockSpec((None, 1, s1), lambda b, l: (l, 0, 0))

    def fixed(shape):
        return pl.BlockSpec(shape, lambda b, l: (0,) * len(shape))

    in_specs = [
        pl.BlockSpec((bb, S, D), lambda b, l: (b, 0, 0)),     # x (+pos), bf16
        pl.BlockSpec((bb, S, 1), lambda b, l: (b, 0, 0)),     # EOT one-hot
        fixed((S, S)),                                        # causal mask
        lv_spec(D), lv_spec(D),                               # ln_1 w/b
        lw_spec(D, 3 * D), lv_spec(3 * D),                    # attn in_proj w/b (q scaled)
        lw_spec(D, D), lv_spec(D),                            # attn out_proj w/b
        lv_spec(D), lv_spec(D),                               # ln_2 w/b
        lw_spec(D, 4 * D), lv_spec(4 * D),                    # mlp c_fc w/b
        lw_spec(4 * D, D), lv_spec(D),                        # mlp c_proj w/b
        fixed((1, D)), fixed((1, D)),                         # ln_final w/b
        fixed((D, E_pad)),                                    # text_projection (bf16)
    ]
    out_spec = pl.BlockSpec((bb, 1, E_pad), lambda b, l: (b, 0, 0))

    # ---- generation-aware VMEM budget -------------------------------------------
    chunk_rows = _mlp_chunk_rows(N)
    wpl = 2 * (D * 3 * D + D * D + D * 4 * D + 4 * D * D)     # bf16 weights / layer
    est = (2 * wpl                                            # double-buffered weights
           + 2 * 2 * bb * S * D                               # bf16 input block (x2)
           + 4 * N * D                                        # residual scratch fp32
           + 2 * N * 3 * D                                    # qkv bf16
           + 4 * chunk_rows * 4 * D * 2                       # chunked MLP fp32 temps
           + 4 * bb * S * S * 3 + 4 * N * D * 2               # attention temps
           + 2 * D * E_pad + 4 * S * S + 4 * bb * S)
    try:
        phys = pltpu.get_tpu_info().vmem_capacity_bytes
    except Exception:
        phys = 128 * 2 ** 20
    cap = 40 * 2 ** 20 if phys <= 64 * 2 ** 20 else 96 * 2 ** 20
    vmem_limit = int(min(max(2 * est, 16 * 2 ** 20), cap))

    kernel = _make_kernel(bb, S, D, n_heads, L, E_pad)
    out = pl.pallas_call(
        kernel,
        out_shape=jax.ShapeDtypeStruct((B, 1, E_pad), f32),
        grid_spec=pltpu.PrefetchScalarGridSpec(
            num_scalar_prefetch=0,
            grid=(nb, L),
            in_specs=in_specs,
            out_specs=out_spec,
            scratch_shapes=[pltpu.VMEM((N, D), f32)],         # residual stream x
        ),
        compiler_params=pltpu.CompilerParams(
            dimension_semantics=("parallel", "arbitrary"),
            vmem_limit_bytes=vmem_limit),
    )(x_in, eot_onehot, causal,
      ln1_w, ln1_b, in_w, in_b, out_w, out_b,
      ln2_w, ln2_b, fc_w, fc_b, pj_w, pj_b,
      lnf_w, lnf_b, proj)
    return out[:, 0, :E]


def init_params(key, L, S, D, E):
    ks = jax.random.split(key, 16)
    std = 0.05
    p = {
        'pos':   0.01 * jax.random.normal(ks[0], (S, D)),
        'ln1_w': 1.0 + 0.1 * jax.random.normal(ks[1], (L, D)),
        'ln1_b': 0.1 * jax.random.normal(ks[2], (L, D)),
        'in_w':  std * jax.random.normal(ks[3], (L, 3 * D, D)),      # PyTorch (out, in)
        'in_b':  0.01 * jax.random.normal(ks[4], (L, 3 * D)),
        'out_w': std * jax.random.normal(ks[5], (L, D, D)),
        'out_b': 0.01 * jax.random.normal(ks[6], (L, D)),
        'ln2_w': 1.0 + 0.1 * jax.random.normal(ks[7], (L, D)),
        'ln2_b': 0.1 * jax.random.normal(ks[8], (L, D)),
        'fc_w':  std * jax.random.normal(ks[9], (L, 4 * D, D)),
        'fc_b':  0.01 * jax.random.normal(ks[10], (L, 4 * D)),
        'pj_w':  std * jax.random.normal(ks[11], (L, D, 4 * D)),
        'pj_b':  0.01 * jax.random.normal(ks[12], (L, D)),
        'lnf_w': 1.0 + 0.1 * jax.random.normal(ks[13], (D,)),
        'lnf_b': 0.1 * jax.random.normal(ks[14], (D,)),
        'proj':  std * jax.random.normal(ks[15], (D, E)),
    }
    return {k: v.astype(jnp.float32) for k, v in p.items()}


def text_encoder_ref(x, tok, params, n_heads):
    # plain-JAX fp32 reference mirroring the PyTorch TextEncoder semantics
    def ln(v, w, b):
        mu = v.mean(-1, keepdims=True)
        var = ((v - mu) ** 2).mean(-1, keepdims=True)
        return (v - mu) / jnp.sqrt(var + 1e-5) * w + b

    x = x + params['pos'][None]
    B, S, D = x.shape
    L = params['in_w'].shape[0]
    Dh = D // n_heads
    mask = jnp.where(jnp.tril(jnp.ones((S, S), bool)), 0.0, -jnp.inf)
    for l in range(L):
        h = ln(x, params['ln1_w'][l], params['ln1_b'][l])
        qkv = h @ params['in_w'][l].T + params['in_b'][l]
        q, k, v = jnp.split(qkv, 3, axis=-1)

        def heads(t):
            return t.reshape(B, S, n_heads, Dh).transpose(0, 2, 1, 3)

        q, k, v = heads(q), heads(k), heads(v)
        s = (q @ k.transpose(0, 1, 3, 2)) / (Dh ** 0.5) + mask
        p = jax.nn.softmax(s, axis=-1)
        o = (p @ v).transpose(0, 2, 1, 3).reshape(B, S, D)
        x = x + o @ params['out_w'][l].T + params['out_b'][l]
        h = ln(x, params['ln2_w'][l], params['ln2_b'][l])
        h = h @ params['fc_w'][l].T + params['fc_b'][l]
        h = h * jax.nn.sigmoid(1.702 * h)
        x = x + h @ params['pj_w'][l].T + params['pj_b'][l]
    x = ln(x, params['lnf_w'], params['lnf_b'])
    eot = jnp.argmax(tok, axis=-1)
    sel = x[jnp.arange(B), eot]
    return sel @ params['proj']


if __name__ == "__main__":
    B, S, D, H, L, E = 2, 8, 64, 2, 2, 32   # batch, seq, width, heads, layers, embed_dim
    key = jax.random.PRNGKey(0)
    kx, kt, kp = jax.random.split(key, 3)
    params = init_params(kp, L, S, D, E)
    x = jax.random.normal(kx, (B, S, D), jnp.float32)
    tok = jax.random.randint(kt, (B, S), 1, 400, jnp.int32)   # tokenized_prompts

    out = text_encoder(x, tok, params, n_heads=H)
    out = jax.block_until_ready(out)
    assert out.shape == (B, E)

    ref = text_encoder_ref(x, tok, params, n_heads=H)
    np.testing.assert_allclose(np.asarray(out), np.asarray(ref), rtol=2e-2, atol=2e-2)

    print("KERNEL_OK")
</pallas_src>

<mosaic_0001>
module attributes {stable_mosaic.version = 11 : i64} {
  func.func @kernel(%arg0: i32, %arg1: i32, %arg2: memref<2x8x64xbf16, #tpu.memory_space<vmem>>, %arg3: memref<2x8x1xf32, #tpu.memory_space<vmem>>, %arg4: memref<8x8xf32, #tpu.memory_space<vmem>>, %arg5: memref<1x1x64xf32, #tpu.memory_space<vmem>>, %arg6: memref<1x1x64xf32, #tpu.memory_space<vmem>>, %arg7: memref<1x64x192xbf16, #tpu.memory_space<vmem>>, %arg8: memref<1x1x192xf32, #tpu.memory_space<vmem>>, %arg9: memref<1x64x64xbf16, #tpu.memory_space<vmem>>, %arg10: memref<1x1x64xf32, #tpu.memory_space<vmem>>, %arg11: memref<1x1x64xf32, #tpu.memory_space<vmem>>, %arg12: memref<1x1x64xf32, #tpu.memory_space<vmem>>, %arg13: memref<1x64x256xbf16, #tpu.memory_space<vmem>>, %arg14: memref<1x1x256xf32, #tpu.memory_space<vmem>>, %arg15: memref<1x256x64xbf16, #tpu.memory_space<vmem>>, %arg16: memref<1x1x64xf32, #tpu.memory_space<vmem>>, %arg17: memref<1x64xf32, #tpu.memory_space<vmem>>, %arg18: memref<1x64xf32, #tpu.memory_space<vmem>>, %arg19: memref<64x128xbf16, #tpu.memory_space<vmem>>, %arg20: memref<2x1x128xf32, #tpu.memory_space<vmem>>, %arg21: memref<16x64xf32, #tpu.memory_space<vmem>>) attributes {dimension_semantics = [#tpu.dimension_semantics<parallel>, #tpu.dimension_semantics<arbitrary>], iteration_bounds = array<i64: 1, 2>, scalar_prefetch = 0 : i64, scratch_operands = 1 : i64, tpu.core_type = #tpu.core_type<tc>, window_params = [{transform_indices = @transform_0, window_bounds = array<i64: 2, 8, 64>}, {transform_indices = @transform_1, window_bounds = array<i64: 2, 8, 1>}, {pipeline_mode = #tpu.pipeline_mode<synchronous>, transform_indices = @transform_2, window_bounds = array<i64: 8, 8>}, {transform_indices = @transform_3, window_bounds = array<i64: 1, 1, 64>}, {transform_indices = @transform_4, window_bounds = array<i64: 1, 1, 64>}, {transform_indices = @transform_5, window_bounds = array<i64: 1, 64, 192>}, {transform_indices = @transform_6, window_bounds = array<i64: 1, 1, 192>}, {transform_indices = @transform_7, window_bounds = array<i64: 1, 64, 64>}, {transform_indices = @transform_8, window_bounds = array<i64: 1, 1, 64>}, {transform_indices = @transform_9, window_bounds = array<i64: 1, 1, 64>}, {transform_indices = @transform_10, window_bounds = array<i64: 1, 1, 64>}, {transform_indices = @transform_11, window_bounds = array<i64: 1, 64, 256>}, {transform_indices = @transform_12, window_bounds = array<i64: 1, 1, 256>}, {transform_indices = @transform_13, window_bounds = array<i64: 1, 256, 64>}, {transform_indices = @transform_14, window_bounds = array<i64: 1, 1, 64>}, {pipeline_mode = #tpu.pipeline_mode<synchronous>, transform_indices = @transform_15, window_bounds = array<i64: 1, 64>}, {pipeline_mode = #tpu.pipeline_mode<synchronous>, transform_indices = @transform_16, window_bounds = array<i64: 1, 64>}, {pipeline_mode = #tpu.pipeline_mode<synchronous>, transform_indices = @transform_17, window_bounds = array<i64: 64, 128>}, {transform_indices = @transform_18, window_bounds = array<i64: 2, 1, 128>}]} {
    %c0_i32 = arith.constant 0 : i32
    %0 = arith.cmpi eq, %arg1, %c0_i32 : i32
    %1 = arith.extui %0 : i1 to i32
    %c0_i32_0 = arith.constant 0 : i32
    %2 = arith.cmpi ne, %1, %c0_i32_0 : i32
    scf.if %2 {
      %c0_70 = arith.constant 0 : index
      %c0_71 = arith.constant 0 : index
      %c0_72 = arith.constant 0 : index
      %153 = vector.load %arg2[%c0_70, %c0_71, %c0_72] : memref<2x8x64xbf16, #tpu.memory_space<vmem>>, vector<2x8x64xbf16>
      %154 = arith.extf %153 : vector<2x8x64xbf16> to vector<2x8x64xf32>
      %155 = vector.shape_cast %154 : vector<2x8x64xf32> to vector<16x64xf32>
      %c0_73 = arith.constant 0 : index
      %c0_74 = arith.constant 0 : index
      %156 = vector.load %arg21[%c0_73, %c0_74] : memref<16x64xf32, #tpu.memory_space<vmem>>, vector<16x64xf32>
      tpu.vector_store %arg21[%c0_73, %c0_74], %155 {strides = array<i32>} : memref<16x64xf32, #tpu.memory_space<vmem>>, vector<16x64xf32>,
    } else {
    }
    %c0 = arith.constant 0 : index
    %c0_1 = arith.constant 0 : index
    %3 = vector.load %arg21[%c0, %c0_1] : memref<16x64xf32, #tpu.memory_space<vmem>>, vector<16x64xf32>
    %c0_2 = arith.constant 0 : index
    %c0_3 = arith.constant 0 : index
    %c0_4 = arith.constant 0 : index
    %4 = vector.load %arg5[%c0_2, %c0_3, %c0_4] : memref<1x1x64xf32, #tpu.memory_space<vmem>>, vector<1x1x64xf32>
    %5 = vector.shape_cast %4 : vector<1x1x64xf32> to vector<1x64xf32>
    %c0_5 = arith.constant 0 : index
    %c0_6 = arith.constant 0 : index
    %c0_7 = arith.constant 0 : index
    %6 = vector.load %arg6[%c0_5, %c0_6, %c0_7] : memref<1x1x64xf32, #tpu.memory_space<vmem>>, vector<1x1x64xf32>
    %7 = vector.shape_cast %6 : vector<1x1x64xf32> to vector<1x64xf32>
    %cst = arith.constant dense<0.000000e+00> : vector<16xf32>
    %8 = vector.multi_reduction <add>, %3, %cst [1] : vector<16x64xf32> to vector<16xf32>
    %9 = vector.shape_cast %8 : vector<16xf32> to vector<16x1xf32>
    %cst_8 = arith.constant 6.400000e+01 : f32
    %10 = vector.broadcast %cst_8 : f32 to vector<16x1xf32>
    %11 = arith.divf %9, %10 : vector<16x1xf32>
    %12 = vector.broadcast %11 : vector<16x1xf32> to vector<16x64xf32>
    %13 = arith.subf %3, %12 : vector<16x64xf32>
    %14 = arith.mulf %13, %13 : vector<16x64xf32>
    %cst_9 = arith.constant dense<0.000000e+00> : vector<16xf32>
    %15 = vector.multi_reduction <add>, %14, %cst_9 [1] : vector<16x64xf32> to vector<16xf32>
    %16 = vector.shape_cast %15 : vector<16xf32> to vector<16x1xf32>
    %cst_10 = arith.constant 6.400000e+01 : f32
    %17 = vector.broadcast %cst_10 : f32 to vector<16x1xf32>
    %18 = arith.divf %16, %17 : vector<16x1xf32>
    %19 = vector.broadcast %11 : vector<16x1xf32> to vector<16x64xf32>
    %20 = arith.subf %3, %19 : vector<16x64xf32>
    %cst_11 = arith.constant 9.99999974E-6 : f32
    %21 = vector.broadcast %cst_11 : f32 to vector<16x1xf32>
    %22 = arith.addf %18, %21 : vector<16x1xf32>
    %23 = math.rsqrt %22 : vector<16x1xf32>
    %24 = vector.broadcast %23 : vector<16x1xf32> to vector<16x64xf32>
    %25 = arith.mulf %20, %24 : vector<16x64xf32>
    %26 = vector.broadcast %5 : vector<1x64xf32> to vector<16x64xf32>
    %27 = arith.mulf %25, %26 : vector<16x64xf32>
    %28 = vector.broadcast %7 : vector<1x64xf32> to vector<16x64xf32>
    %29 = arith.addf %27, %28 : vector<16x64xf32>
    %30 = arith.truncf %29 : vector<16x64xf32> to vector<16x64xbf16>
    %c0_12 = arith.constant 0 : index
    %c0_13 = arith.constant 0 : index
    %c0_14 = arith.constant 0 : index
    %31 = vector.load %arg7[%c0_12, %c0_13, %c0_14] : memref<1x64x192xbf16, #tpu.memory_space<vmem>>, vector<1x64x192xbf16>
    %32 = vector.shape_cast %31 : vector<1x64x192xbf16> to vector<64x192xbf16>
    %cst_15 = arith.constant dense<0.000000e+00> : vector<16x192xf32>
    %33 = tpu.matmul %30, %32, %cst_15 {dimension_numbers = #tpu.dot_dimension_numbers<[1], [0], [0], [1], [0, 0, 1, 1], [], []>} : vector<16x64xbf16>, vector<64x192xbf16>, vector<16x192xf32> -> vector<16x192xf32>
    %c0_16 = arith.constant 0 : index
    %c0_17 = arith.constant 0 : index
    %c0_18 = arith.constant 0 : index
    %34 = vector.load %arg8[%c0_16, %c0_17, %c0_18] : memref<1x1x192xf32, #tpu.memory_space<vmem>>, vector<1x1x192xf32>
    %35 = vector.shape_cast %34 : vector<1x1x192xf32> to vector<1x192xf32>
    %36 = vector.broadcast %35 : vector<1x192xf32> to vector<16x192xf32>
    %37 = arith.addf %33, %36 : vector<16x192xf32>
    %38 = arith.truncf %37 : vector<16x192xf32> to vector<16x192xbf16>
    %c0_19 = arith.constant 0 : index
    %c0_20 = arith.constant 0 : index
    %39 = vector.load %arg4[%c0_19, %c0_20] : memref<8x8xf32, #tpu.memory_space<vmem>>, vector<8x8xf32>
    %40 = vector.extract_strided_slice %38 {offsets = [0, 0], sizes = [16, 32], strides = [1, 1]} : vector<16x192xbf16> to vector<16x32xbf16>
    %41 = vector.shape_cast %40 : vector<16x32xbf16> to vector<2x8x32xbf16>
    %42 = vector.extract_strided_slice %38 {offsets = [0, 64], sizes = [16, 32], strides = [1, 1]} : vector<16x192xbf16> to vector<16x32xbf16>
    %43 = vector.shape_cast %42 : vector<16x32xbf16> to vector<2x8x32xbf16>
    %44 = vector.extract_strided_slice %38 {offsets = [0, 128], sizes = [16, 32], strides = [1, 1]} : vector<16x192xbf16> to vector<16x32xbf16>
    %45 = vector.shape_cast %44 : vector<16x32xbf16> to vector<2x8x32xbf16>
    "tpu.trace_start"() <{level = 10 : i32, message = "bqd,bkd->bqk"}> : () -> ()
    %cst_21 = arith.constant dense<0.000000e+00> : vector<2x8x8xf32>
    %46 = tpu.matmul %41, %43, %cst_21 {dimension_numbers = #tpu.dot_dimension_numbers<[2], [2], [1], [1], [0, 0, 0, 1, 1, 1], [0], [0]>} : vector<2x8x32xbf16>, vector<2x8x32xbf16>, vector<2x8x8xf32> -> vector<2x8x8xf32>
    "tpu.trace_stop"() : () -> ()
    %47 = vector.shape_cast %39 : vector<8x8xf32> to vector<1x8x8xf32>
    %48 = vector.broadcast %47 : vector<1x8x8xf32> to vector<2x8x8xf32>
    %49 = arith.addf %46, %48 : vector<2x8x8xf32>
    %cst_22 = arith.constant dense<0xFF800000> : vector<2x8xf32>
    %50 = vector.multi_reduction <maximumf>, %49, %cst_22 [2] : vector<2x8x8xf32> to vector<2x8xf32>
    %51 = vector.shape_cast %50 : vector<2x8xf32> to vector<2x8x1xf32>
    %52 = vector.broadcast %51 : vector<2x8x1xf32> to vector<2x8x8xf32>
    %53 = arith.subf %49, %52 : vector<2x8x8xf32>
    %54 = math.exp %53 : vector<2x8x8xf32>
    %cst_23 = arith.constant dense<0.000000e+00> : vector<2x8xf32>
    %55 = vector.multi_reduction <add>, %54, %cst_23 [2] : vector<2x8x8xf32> to vector<2x8xf32>
    %56 = vector.shape_cast %55 : vector<2x8xf32> to vector<2x8x1xf32>
    %57 = tpu.reciprocal %56 {approx = true} : vector<2x8x1xf32> -> vector<2x8x1xf32>
    %58 = vector.broadcast %57 : vector<2x8x1xf32> to vector<2x8x8xf32>
    %59 = arith.mulf %54, %58 : vector<2x8x8xf32>
    %60 = arith.truncf %59 : vector<2x8x8xf32> to vector<2x8x8xbf16>
    "tpu.trace_start"() <{level = 10 : i32, message = "bqk,bkd->bqd"}> : () -> ()
    %cst_24 = arith.constant dense<0.000000e+00> : vector<2x8x32xf32>
    %61 = tpu.matmul %60, %45, %cst_24 {dimension_numbers = #tpu.dot_dimension_numbers<[2], [1], [1], [2], [0, 0, 0, 1, 1, 2], [0], [0]>} : vector<2x8x8xbf16>, vector<2x8x32xbf16>, vector<2x8x32xf32> -> vector<2x8x32xf32>
    "tpu.trace_stop"() : () -> ()
    %62 = vector.shape_cast %61 : vector<2x8x32xf32> to vector<16x32xf32>
    %63 = vector.extract_strided_slice %38 {offsets = [0, 32], sizes = [16, 32], strides = [1, 1]} : vector<16x192xbf16> to vector<16x32xbf16>
    %64 = vector.shape_cast %63 : vector<16x32xbf16> to vector<2x8x32xbf16>
    %65 = vector.extract_strided_slice %38 {offsets = [0, 96], sizes = [16, 32], strides = [1, 1]} : vector<16x192xbf16> to vector<16x32xbf16>
    %66 = vector.shape_cast %65 : vector<16x32xbf16> to vector<2x8x32xbf16>
    %67 = vector.extract_strided_slice %38 {offsets = [0, 160], sizes = [16, 32], strides = [1, 1]} : vector<16x192xbf16> to vector<16x32xbf16>
    %68 = vector.shape_cast %67 : vector<16x32xbf16> to vector<2x8x32xbf16>
    "tpu.trace_start"() <{level = 10 : i32, message = "bqd,bkd->bqk"}> : () -> ()
    %cst_25 = arith.constant dense<0.000000e+00> : vector<2x8x8xf32>
    %69 = tpu.matmul %64, %66, %cst_25 {dimension_numbers = #tpu.dot_dimension_numbers<[2], [2], [1], [1], [0, 0, 0, 1, 1, 1], [0], [0]>} : vector<2x8x32xbf16>, vector<2x8x32xbf16>, vector<2x8x8xf32> -> vector<2x8x8xf32>
    "tpu.trace_stop"() : () -> ()
    %70 = vector.shape_cast %39 : vector<8x8xf32> to vector<1x8x8xf32>
    %71 = vector.broadcast %70 : vector<1x8x8xf32> to vector<2x8x8xf32>
    %72 = arith.addf %69, %71 : vector<2x8x8xf32>
    %cst_26 = arith.constant dense<0xFF800000> : vector<2x8xf32>
    %73 = vector.multi_reduction <maximumf>, %72, %cst_26 [2] : vector<2x8x8xf32> to vector<2x8xf32>
    %74 = vector.shape_cast %73 : vector<2x8xf32> to vector<2x8x1xf32>
    %75 = vector.broadcast %74 : vector<2x8x1xf32> to vector<2x8x8xf32>
    %76 = arith.subf %72, %75 : vector<2x8x8xf32>
    %77 = math.exp %76 : vector<2x8x8xf32>
    %cst_27 = arith.constant dense<0.000000e+00> : vector<2x8xf32>
    %78 = vector.multi_reduction <add>, %77, %cst_27 [2] : vector<2x8x8xf32> to vector<2x8xf32>
    %79 = vector.shape_cast %78 : vector<2x8xf32> to vector<2x8x1xf32>
    %80 = tpu.reciprocal %79 {approx = true} : vector<2x8x1xf32> -> vector<2x8x1xf32>
    %81 = vector.broadcast %80 : vector<2x8x1xf32> to vector<2x8x8xf32>
    %82 = arith.mulf %77, %81 : vector<2x8x8xf32>
    %83 = arith.truncf %82 : vector<2x8x8xf32> to vector<2x8x8xbf16>
    "tpu.trace_start"() <{level = 10 : i32, message = "bqk,bkd->bqd"}> : () -> ()
    %cst_28 = arith.constant dense<0.000000e+00> : vector<2x8x32xf32>
    %84 = tpu.matmul %83, %68, %cst_28 {dimension_numbers = #tpu.dot_dimension_numbers<[2], [1], [1], [2], [0, 0, 0, 1, 1, 2], [0], [0]>} : vector<2x8x8xbf16>, vector<2x8x32xbf16>, vector<2x8x32xf32> -> vector<2x8x32xf32>
    "tpu.trace_stop"() : () -> ()
    %85 = vector.shape_cast %84 : vector<2x8x32xf32> to vector<16x32xf32>
    %86 = tpu.concatenate %62, %85 in 1 : vector<16x32xf32>, vector<16x32xf32> -> vector<16x64xf32>
    %87 = arith.truncf %86 : vector<16x64xf32> to vector<16x64xbf16>
    %c0_29 = arith.constant 0 : index
    %c0_30 = arith.constant 0 : index
    %c0_31 = arith.constant 0 : index
    %88 = vector.load %arg9[%c0_29, %c0_30, %c0_31] : memref<1x64x64xbf16, #tpu.memory_space<vmem>>, vector<1x64x64xbf16>
    %89 = vector.shape_cast %88 : vector<1x64x64xbf16> to vector<64x64xbf16>
    %cst_32 = arith.constant dense<0.000000e+00> : vector<16x64xf32>
    %90 = tpu.matmul %87, %89, %cst_32 {dimension_numbers = #tpu.dot_dimension_numbers<[1], [0], [0], [1], [0, 0, 1, 1], [], []>} : vector<16x64xbf16>, vector<64x64xbf16>, vector<16x64xf32> -> vector<16x64xf32>
    %c0_33 = arith.constant 0 : index
    %c0_34 = arith.constant 0 : index
    %c0_35 = arith.constant 0 : index
    %91 = vector.load %arg10[%c0_33, %c0_34, %c0_35] : memref<1x1x64xf32, #tpu.memory_space<vmem>>, vector<1x1x64xf32>
    %92 = vector.shape_cast %91 : vector<1x1x64xf32> to vector<1x64xf32>
    %93 = vector.broadcast %92 : vector<1x64xf32> to vector<16x64xf32>
    %94 = arith.addf %90, %93 : vector<16x64xf32>
    %95 = arith.addf %3, %94 : vector<16x64xf32>
    %c0_36 = arith.constant 0 : index
    %c0_37 = arith.constant 0 : index
    %96 = vector.load %arg21[%c0_36, %c0_37] : memref<16x64xf32, #tpu.memory_space<vmem>>, vector<16x64xf32>
    tpu.vector_store %arg21[%c0_36, %c0_37], %95 {strides = array<i32>} : memref<16x64xf32, #tpu.memory_space<vmem>>, vector<16x64xf32>,
    %c0_38 = arith.constant 0 : index
    %c0_39 = arith.constant 0 : index
    %97 = vector.load %arg21[%c0_38, %c0_39] : memref<16x64xf32, #tpu.memory_space<vmem>>, vector<16x64xf32>
    %c0_40 = arith.constant 0 : index
    %c0_41 = arith.constant 0 : index
    %c0_42 = arith.constant 0 : index
    %98 = vector.load %arg11[%c0_40, %c0_41, %c0_42] : memref<1x1x64xf32, #tpu.memory_space<vmem>>, vector<1x1x64xf32>
    %99 = vector.shape_cast %98 : vector<1x1x64xf32> to vector<1x64xf32>
    %c0_43 = arith.constant 0 : index
    %c0_44 = arith.constant 0 : index
    %c0_45 = arith.constant 0 : index
    %100 = vector.load %arg12[%c0_43, %c0_44, %c0_45] : memref<1x1x64xf32, #tpu.memory_space<vmem>>, vector<1x1x64xf32>
    %101 = vector.shape_cast %100 : vector<1x1x64xf32> to vector<1x64xf32>
    %cst_46 = arith.constant dense<0.000000e+00> : vector<16xf32>
    %102 = vector.multi_reduction <add>, %97, %cst_46 [1] : vector<16x64xf32> to vector<16xf32>
    %103 = vector.shape_cast %102 : vector<16xf32> to vector<16x1xf32>
    %cst_47 = arith.constant 6.400000e+01 : f32
    %104 = vector.broadcast %cst_47 : f32 to vector<16x1xf32>
    %105 = arith.divf %103, %104 : vector<16x1xf32>
    %106 = vector.broadcast %105 : vector<16x1xf32> to vector<16x64xf32>
    %107 = arith.subf %97, %106 : vector<16x64xf32>
    %108 = arith.mulf %107, %107 : vector<16x64xf32>
    %cst_48 = arith.constant dense<0.000000e+00> : vector<16xf32>
    %109 = vector.multi_reduction <add>, %108, %cst_48 [1] : vector<16x64xf32> to vector<16xf32>
    %110 = vector.shape_cast %109 : vector<16xf32> to vector<16x1xf32>
    %cst_49 = arith.constant 6.400000e+01 : f32
    %111 = vector.broadcast %cst_49 : f32 to vector<16x1xf32>
    %112 = arith.divf %110, %111 : vector<16x1xf32>
    %113 = vector.broadcast %105 : vector<16x1xf32> to vector<16x64xf32>
    %114 = arith.subf %97, %113 : vector<16x64xf32>
    %cst_50 = arith.constant 9.99999974E-6 : f32
    %115 = vector.broadcast %cst_50 : f32 to vector<16x1xf32>
    %116 = arith.addf %112, %115 : vector<16x1xf32>
    %117 = math.rsqrt %116 : vector<16x1xf32>
    %118 = vector.broadcast %117 : vector<16x1xf32> to vector<16x64xf32>
    %119 = arith.mulf %114, %118 : vector<16x64xf32>
    %120 = vector.broadcast %99 : vector<1x64xf32> to vector<16x64xf32>
    %121 = arith.mulf %119, %120 : vector<16x64xf32>
    %122 = vector.broadcast %101 : vector<1x64xf32> to vector<16x64xf32>
    %123 = arith.addf %121, %122 : vector<16x64xf32>
    %124 = arith.truncf %123 : vector<16x64xf32> to vector<16x64xbf16>
    %c0_51 = arith.constant 0 : index
    %c0_52 = arith.constant 0 : index
    %c0_53 = arith.constant 0 : index
    %125 = vector.load %arg13[%c0_51, %c0_52, %c0_53] : memref<1x64x256xbf16, #tpu.memory_space<vmem>>, vector<1x64x256xbf16>
    %126 = vector.shape_cast %125 : vector<1x64x256xbf16> to vector<64x256xbf16>
    %cst_54 = arith.constant dense<0.000000e+00> : vector<16x256xf32>
    %127 = tpu.matmul %124, %126, %cst_54 {dimension_numbers = #tpu.dot_dimension_numbers<[1], [0], [0], [1], [0, 0, 1, 1], [], []>} : vector<16x64xbf16>, vector<64x256xbf16>, vector<16x256xf32> -> vector<16x256xf32>
    %c0_55 = arith.constant 0 : index
    %c0_56 = arith.constant 0 : index
    %c0_57 = arith.constant 0 : index
    %128 = vector.load %arg14[%c0_55, %c0_56, %c0_57] : memref<1x1x256xf32, #tpu.memory_space<vmem>>, vector<1x1x256xf32>
    %129 = vector.shape_cast %128 : vector<1x1x256xf32> to vector<1x256xf32>
    %130 = vector.broadcast %129 : vector<1x256xf32> to vector<16x256xf32>
    %131 = arith.addf %127, %130 : vector<16x256xf32>
    %cst_58 = arith.constant 1.702000e+00 : f32
    %132 = vector.broadcast %cst_58 : f32 to vector<16x256xf32>
    %133 = arith.mulf %132, %131 : vector<16x256xf32>
    %134 = arith.negf %133 : vector<16x256xf32>
    %135 = math.exp %134 : vector<16x256xf32>
    %cst_59 = arith.constant 1.000000e+00 : f32
    %136 = vector.broadcast %cst_59 : f32 to vector<16x256xf32>
    %137 = arith.addf %136, %135 : vector<16x256xf32>
    %138 = arith.divf %136, %137 : vector<16x256xf32>
    %139 = arith.mulf %131, %138 : vector<16x256xf32>
    %140 = arith.truncf %139 : vector<16x256xf32> to vector<16x256xbf16>
    %c0_60 = arith.constant 0 : index
    %c0_61 = arith.constant 0 : index
    %c0_62 = arith.constant 0 : index
    %141 = vector.load %arg15[%c0_60, %c0_61, %c0_62] : memref<1x256x64xbf16, #tpu.memory_space<vmem>>, vector<1x256x64xbf16>
    %142 = vector.shape_cast %141 : vector<1x256x64xbf16> to vector<256x64xbf16>
    %cst_63 = arith.constant dense<0.000000e+00> : vector<16x64xf32>
    %143 = tpu.matmul %140, %142, %cst_63 {dimension_numbers = #tpu.dot_dimension_numbers<[1], [0], [0], [1], [0, 0, 1, 1], [], []>} : vector<16x256xbf16>, vector<256x64xbf16>, vector<16x64xf32> -> vector<16x64xf32>
    %c0_64 = arith.constant 0 : index
    %c0_65 = arith.constant 0 : index
    %c0_66 = arith.constant 0 : index
    %144 = vector.load %arg16[%c0_64, %c0_65, %c0_66] : memref<1x1x64xf32, #tpu.memory_space<vmem>>, vector<1x1x64xf32>
    %145 = vector.shape_cast %144 : vector<1x1x64xf32> to vector<1x64xf32>
    %146 = vector.broadcast %145 : vector<1x64xf32> to vector<16x64xf32>
    %147 = arith.addf %143, %146 : vector<16x64xf32>
    %148 = arith.addf %97, %147 : vector<16x64xf32>
    %c0_67 = arith.constant 0 : index
    %c0_68 = arith.constant 0 : index
    %149 = vector.load %arg21[%c0_67, %c0_68] : memref<16x64xf32, #tpu.memory_space<vmem>>, vector<16x64xf32>
    tpu.vector_store %arg21[%c0_67, %c0_68], %148 {strides = array<i32>} : memref<16x64xf32, #tpu.memory_space<vmem>>, vector<16x64xf32>,
    %c1_i32 = arith.constant 1 : i32
    %150 = arith.cmpi eq, %arg1, %c1_i32 : i32
    %151 = arith.extui %150 : i1 to i32
    %c0_i32_69 = arith.constant 0 : i32
    %152 = arith.cmpi ne, %151, %c0_i32_69 : i32
    scf.if %152 {
      %c0_70 = arith.constant 0 : index
      %c0_71 = arith.constant 0 : index
      %153 = vector.load %arg21[%c0_70, %c0_71] : memref<16x64xf32, #tpu.memory_space<vmem>>, vector<16x64xf32>
      %154 = vector.shape_cast %153 : vector<16x64xf32> to vector<2x8x64xf32>
      %c0_72 = arith.constant 0 : index
      %c0_73 = arith.constant 0 : index
      %c0_74 = arith.constant 0 : index
      %155 = vector.load %arg3[%c0_72, %c0_73, %c0_74] : memref<2x8x1xf32, #tpu.memory_space<vmem>>, vector<2x8x1xf32>
      %156 = vector.broadcast %155 : vector<2x8x1xf32> to vector<2x8x64xf32>
      %157 = arith.mulf %154, %156 : vector<2x8x64xf32>
      %cst_75 = arith.constant dense<0.000000e+00> : vector<2x64xf32>
      %158 = vector.multi_reduction <add>, %157, %cst_75 [1] : vector<2x8x64xf32> to vector<2x64xf32>
      %c0_76 = arith.constant 0 : index
      %c0_77 = arith.constant 0 : index
      %159 = vector.load %arg17[%c0_76, %c0_77] : memref<1x64xf32, #tpu.memory_space<vmem>>, vector<1x64xf32>
      %c0_78 = arith.constant 0 : index
      %c0_79 = arith.constant 0 : index
      %160 = vector.load %arg18[%c0_78, %c0_79] : memref<1x64xf32, #tpu.memory_space<vmem>>, vector<1x64xf32>
      %cst_80 = arith.constant dense<0.000000e+00> : vector<2xf32>
      %161 = vector.multi_reduction <add>, %158, %cst_80 [1] : vector<2x64xf32> to vector<2xf32>
      %162 = vector.shape_cast %161 : vector<2xf32> to vector<2x1xf32>
      %cst_81 = arith.constant 6.400000e+01 : f32
      %163 = vector.broadcast %cst_81 : f32 to vector<2x1xf32>
      %164 = arith.divf %162, %163 : vector<2x1xf32>
      %165 = vector.broadcast %164 : vector<2x1xf32> to vector<2x64xf32>
      %166 = arith.subf %158, %165 : vector<2x64xf32>
      %167 = arith.mulf %166, %166 : vector<2x64xf32>
      %cst_82 = arith.constant dense<0.000000e+00> : vector<2xf32>
      %168 = vector.multi_reduction <add>, %167, %cst_82 [1] : vector<2x64xf32> to vector<2xf32>
      %169 = vector.shape_cast %168 : vector<2xf32> to vector<2x1xf32>
      %cst_83 = arith.constant 6.400000e+01 : f32
      %170 = vector.broadcast %cst_83 : f32 to vector<2x1xf32>
      %171 = arith.divf %169, %170 : vector<2x1xf32>
      %172 = vector.broadcast %164 : vector<2x1xf32> to vector<2x64xf32>
      %173 = arith.subf %158, %172 : vector<2x64xf32>
      %cst_84 = arith.constant 9.99999974E-6 : f32
      %174 = vector.broadcast %cst_84 : f32 to vector<2x1xf32>
      %175 = arith.addf %171, %174 : vector<2x1xf32>
      %176 = math.rsqrt %175 : vector<2x1xf32>
      %177 = vector.broadcast %176 : vector<2x1xf32> to vector<2x64xf32>
      %178 = arith.mulf %173, %177 : vector<2x64xf32>
      %179 = vector.broadcast %159 : vector<1x64xf32> to vector<2x64xf32>
      %180 = arith.mulf %178, %179 : vector<2x64xf32>
      %181 = vector.broadcast %160 : vector<1x64xf32> to vector<2x64xf32>
      %182 = arith.addf %180, %181 : vector<2x64xf32>
      %183 = arith.truncf %182 : vector<2x64xf32> to vector<2x64xbf16>
      %c0_85 = arith.constant 0 : index
      %c0_86 = arith.constant 0 : index
      %184 = vector.load %arg19[%c0_85, %c0_86] : memref<64x128xbf16, #tpu.memory_space<vmem>>, vector<64x128xbf16>
      %cst_87 = arith.constant dense<0.000000e+00> : vector<2x128xf32>
      %185 = tpu.matmul %183, %184, %cst_87 {dimension_numbers = #tpu.dot_dimension_numbers<[1], [0], [0], [1], [0, 0, 1, 1], [], []>} : vector<2x64xbf16>, vector<64x128xbf16>, vector<2x128xf32> -> vector<2x128xf32>
      %186 = vector.shape_cast %185 : vector<2x128xf32> to vector<2x1x128xf32>
      %c0_88 = arith.constant 0 : index
      %c0_89 = arith.constant 0 : index
      %c0_90 = arith.constant 0 : index
      %187 = vector.load %arg20[%c0_88, %c0_89, %c0_90] : memref<2x1x128xf32, #tpu.memory_space<vmem>>, vector<2x1x128xf32>
      tpu.vector_store %arg20[%c0_88, %c0_89, %c0_90], %186 {strides = array<i32>} : memref<2x1x128xf32, #tpu.memory_space<vmem>>, vector<2x1x128xf32>,
    } else {
    }
    return
  }
  func.func @transform_0(%arg0: i32, %arg1: i32) -> (i32, i32, i32) {
    %c0_i32 = arith.constant 0 : i32
    %c0_i32_0 = arith.constant 0 : i32
    %c0_i32_1 = arith.constant 0 : i32
    return %arg0, %c0_i32, %c0_i32_0 : i32, i32, i32
  }
  func.func @transform_1(%arg0: i32, %arg1: i32) -> (i32, i32, i32) {
    %c0_i32 = arith.constant 0 : i32
    %c0_i32_0 = arith.constant 0 : i32
    %c0_i32_1 = arith.constant 0 : i32
    return %arg0, %c0_i32, %c0_i32_0 : i32, i32, i32
  }
  func.func @transform_2(%arg0: i32, %arg1: i32) -> (i32, i32) {
    %c0_i32 = arith.constant 0 : i32
    %c0_i32_0 = arith.constant 0 : i32
    %c0_i32_1 = arith.constant 0 : i32
    return %c0_i32, %c0_i32_0 : i32, i32
  }
  func.func @transform_3(%arg0: i32, %arg1: i32) -> (i32, i32, i32) {
    %c0_i32 = arith.constant 0 : i32
    %c0_i32_0 = arith.constant 0 : i32
    %c0_i32_1 = arith.constant 0 : i32
    return %arg1, %c0_i32, %c0_i32_0 : i32, i32, i32
  }
  func.func @transform_4(%arg0: i32, %arg1: i32) -> (i32, i32, i32) {
    %c0_i32 = arith.constant 0 : i32
    %c0_i32_0 = arith.constant 0 : i32
    %c0_i32_1 = arith.constant 0 : i32
    return %arg1, %c0_i32, %c0_i32_0 : i32, i32, i32
  }
  func.func @transform_5(%arg0: i32, %arg1: i32) -> (i32, i32, i32) {
    %c0_i32 = arith.constant 0 : i32
    %c0_i32_0 = arith.constant 0 : i32
    %c0_i32_1 = arith.constant 0 : i32
    return %arg1, %c0_i32, %c0_i32_0 : i32, i32, i32
  }
  func.func @transform_6(%arg0: i32, %arg1: i32) -> (i32, i32, i32) {
    %c0_i32 = arith.constant 0 : i32
    %c0_i32_0 = arith.constant 0 : i32
    %c0_i32_1 = arith.constant 0 : i32
    return %arg1, %c0_i32, %c0_i32_0 : i32, i32, i32
  }
  func.func @transform_7(%arg0: i32, %arg1: i32) -> (i32, i32, i32) {
    %c0_i32 = arith.constant 0 : i32
    %c0_i32_0 = arith.constant 0 : i32
    %c0_i32_1 = arith.constant 0 : i32
    return %arg1, %c0_i32, %c0_i32_0 : i32, i32, i32
  }
  func.func @transform_8(%arg0: i32, %arg1: i32) -> (i32, i32, i32) {
    %c0_i32 = arith.constant 0 : i32
    %c0_i32_0 = arith.constant 0 : i32
    %c0_i32_1 = arith.constant 0 : i32
    return %arg1, %c0_i32, %c0_i32_0 : i32, i32, i32
  }
  func.func @transform_9(%arg0: i32, %arg1: i32) -> (i32, i32, i32) {
    %c0_i32 = arith.constant 0 : i32
    %c0_i32_0 = arith.constant 0 : i32
    %c0_i32_1 = arith.constant 0 : i32
    return %arg1, %c0_i32, %c0_i32_0 : i32, i32, i32
  }
  func.func @transform_10(%arg0: i32, %arg1: i32) -> (i32, i32, i32) {
    %c0_i32 = arith.constant 0 : i32
    %c0_i32_0 = arith.constant 0 : i32
    %c0_i32_1 = arith.constant 0 : i32
    return %arg1, %c0_i32, %c0_i32_0 : i32, i32, i32
  }
  func.func @transform_11(%arg0: i32, %arg1: i32) -> (i32, i32, i32) {
    %c0_i32 = arith.constant 0 : i32
    %c0_i32_0 = arith.constant 0 : i32
    %c0_i32_1 = arith.constant 0 : i32
    return %arg1, %c0_i32, %c0_i32_0 : i32, i32, i32
  }
  func.func @transform_12(%arg0: i32, %arg1: i32) -> (i32, i32, i32) {
    %c0_i32 = arith.constant 0 : i32
    %c0_i32_0 = arith.constant 0 : i32
    %c0_i32_1 = arith.constant 0 : i32
    return %arg1, %c0_i32, %c0_i32_0 : i32, i32, i32
  }
  func.func @transform_13(%arg0: i32, %arg1: i32) -> (i32, i32, i32) {
    %c0_i32 = arith.constant 0 : i32
    %c0_i32_0 = arith.constant 0 : i32
    %c0_i32_1 = arith.constant 0 : i32
    return %arg1, %c0_i32, %c0_i32_0 : i32, i32, i32
  }
  func.func @transform_14(%arg0: i32, %arg1: i32) -> (i32, i32, i32) {
    %c0_i32 = arith.constant 0 : i32
    %c0_i32_0 = arith.constant 0 : i32
    %c0_i32_1 = arith.constant 0 : i32
    return %arg1, %c0_i32, %c0_i32_0 : i32, i32, i32
  }
  func.func @transform_15(%arg0: i32, %arg1: i32) -> (i32, i32) {
    %c0_i32 = arith.constant 0 : i32
    %c0_i32_0 = arith.constant 0 : i32
    %c0_i32_1 = arith.constant 0 : i32
    return %c0_i32, %c0_i32_0 : i32, i32
  }
  func.func @transform_16(%arg0: i32, %arg1: i32) -> (i32, i32) {
    %c0_i32 = arith.constant 0 : i32
    %c0_i32_0 = arith.constant 0 : i32
    %c0_i32_1 = arith.constant 0 : i32
    return %c0_i32, %c0_i32_0 : i32, i32
  }
  func.func @transform_17(%arg0: i32, %arg1: i32) -> (i32, i32) {
    %c0_i32 = arith.constant 0 : i32
    %c0_i32_0 = arith.constant 0 : i32
    %c0_i32_1 = arith.constant 0 : i32
    return %c0_i32, %c0_i32_0 : i32, i32
  }
  func.func @transform_18(%arg0: i32, %arg1: i32) -> (i32, i32, i32) {
    %c0_i32 = arith.constant 0 : i32
    %c0_i32_0 = arith.constant 0 : i32
    %c0_i32_1 = arith.constant 0 : i32
    return %arg0, %c0_i32, %c0_i32_0 : i32, i32, i32
  }
}

</mosaic_0001>

<llo_original>
// kernel: tpu_custom_call.1
$region0: #{tpu_custom_call.1}
  #allocation0 [shape = 'u32[]', space=smem, size = 0x4, offset = 0x4, fixed_abs, tag = 'smem constant byte address 0x4 - core index']
  #allocation1 [shape = 'u32[144,128]{1,0:T(1,128)}', space=vmem, size = 0x12000, scoped, tag = 'internal scratch']
  #allocation2 [shape = 'f32[16,64]{1,0:T(8,128)}', space=vmem, size = 0x2000, scoped, tag = 'scratch operand']
  %s0 = inlined_call_operand.vmem [shape: bf16[2,8,64], index: 0, kind: input, shape index: {}]
  %s1 = inlined_call_operand.vmem [shape: f32[2,8,1], index: 1, kind: input, shape index: {}]
  %s2 = inlined_call_operand.vmem [shape: f32[8,8], index: 2, kind: input, shape index: {}]
  %s3 = inlined_call_operand.vmem [shape: f32[2,1,64], index: 3, kind: input, shape index: {}]
  %s4 = inlined_call_operand.vmem [shape: f32[2,1,64], index: 4, kind: input, shape index: {}]
  %s5 = inlined_call_operand.vmem [shape: bf16[2,64,192], index: 5, kind: input, shape index: {}]
  %s6 = inlined_call_operand.vmem [shape: f32[2,1,192], index: 6, kind: input, shape index: {}]
  %s7 = inlined_call_operand.vmem [shape: bf16[2,64,64], index: 7, kind: input, shape index: {}]
  %s8 = inlined_call_operand.vmem [shape: f32[2,1,64], index: 8, kind: input, shape index: {}]
  %s9 = inlined_call_operand.vmem [shape: f32[2,1,64], index: 9, kind: input, shape index: {}]
  %s10 = inlined_call_operand.vmem [shape: f32[2,1,64], index: 10, kind: input, shape index: {}]
  %s11 = inlined_call_operand.vmem [shape: bf16[2,64,256], index: 11, kind: input, shape index: {}]
  %s12 = inlined_call_operand.vmem [shape: f32[2,1,256], index: 12, kind: input, shape index: {}]
  %s13 = inlined_call_operand.vmem [shape: bf16[2,256,64], index: 13, kind: input, shape index: {}]
  %s14 = inlined_call_operand.vmem [shape: f32[2,1,64], index: 14, kind: input, shape index: {}]
  %s15 = inlined_call_operand.vmem [shape: f32[1,64], index: 15, kind: input, shape index: {}]
  %s16 = inlined_call_operand.vmem [shape: f32[1,64], index: 16, kind: input, shape index: {}]
  %s17 = inlined_call_operand.vmem [shape: bf16[64,128], index: 17, kind: input, shape index: {}]
  %s18 = inlined_call_operand.hbm [shape: f32[2,1,128], index: 18, kind: output, shape index: {}]
  %s19 = sld [smem:[#allocation0]]
  $region113: #{tpu_custom_call.1} parent=0
    _
  %s21 = ssub.s32 1, %s19
  %s22 = scalar_select 0, %s21, %s19
  $region1: #{tpu_custom_call.1} parent=0
    #allocation3 [shape = 'u8[1024]{0}', space=vmem, size = 0x400, scoped, tag = 'output window, operand 0, single buffered']
    #allocation4 [shape = 's32[2]{0}', space=sflag, size = 0x8, scoped, tag = 'scoped memory for tpu_custom_call.1']
    %23 = vsyncpa [#allocation4], 0
    loop: start=0, step=1, limit=4
    $region2: #{tpu_custom_call.1} parent=1 // loop_pre_header
      _
    $region3: #{tpu_custom_call.1} parent=1 // loop_header
      %s25 = sphi 0, %s29
      %p26 = scmp.ge.s32.totalorder %s25, 4
      %s32 = sphi 0, %s44
      %s33 = sphi 0, %s40
      %s34 = sphi 0, %s32
      %s35 = sphi 0, %s33
      %s36 = sphi 0, %s34
      %s37 = sphi 0, %s35
      %s47 = sphi 0, %s49
      %s50 = sphi 0, %s47
      %s51 = sphi 0, %s50
      %s67 = sphi 0, %s51
      %s73 = sphi 0, %s75
      %s76 = sphi 0, %s73
      %s77 = sphi 0, %s76
      %s93 = sphi 0, %s77
      %s97 = sphi 0, %s97
      %s99 = sphi 0, %s97
      %s100 = sphi 0, %s99
      %s114 = sphi 0, %s100
      %s120 = sphi 0, %s122
      %s123 = sphi 0, %s120
      %s124 = sphi 0, %s123
      %s140 = sphi 0, %s124
      %s146 = sphi 0, %s148
      %s149 = sphi 0, %s146
      %s150 = sphi 0, %s149
      %s166 = sphi 0, %s150
      %s172 = sphi 0, %s174
      %s175 = sphi 0, %s172
      %s176 = sphi 0, %s175
      %s192 = sphi 0, %s176
      %s198 = sphi 0, %s200
      %s201 = sphi 0, %s198
      %s202 = sphi 0, %s201
      %s218 = sphi 0, %s202
      %s224 = sphi 0, %s226
      %s227 = sphi 0, %s224
      %s228 = sphi 0, %s227
      %s244 = sphi 0, %s228
      %s250 = sphi 0, %s252
      %s253 = sphi 0, %s250
      %s254 = sphi 0, %s253
      %s270 = sphi 0, %s254
      %s276 = sphi 0, %s278
      %s279 = sphi 0, %s276
      %s280 = sphi 0, %s279
      %s296 = sphi 0, %s280
      %s302 = sphi 0, %s304
      %s305 = sphi 0, %s302
      %s306 = sphi 0, %s305
      %s322 = sphi 0, %s306
      %s328 = sphi 0, %s330
      %s331 = sphi 0, %s328
      %s332 = sphi 0, %s331
      %s348 = sphi 0, %s332
      %s354 = sphi 0, %s356
      %s357 = sphi 0, %s354
      %s358 = sphi 0, %s357
      %s374 = sphi 0, %s358
      %s380 = sphi 0, %s382
      %s383 = sphi 0, %s380
      %s384 = sphi 0, %s383
      %s400 = sphi 0, %s384
      %s406 = sphi 0, %s408
      %s409 = sphi 0, %s406
      %s410 = sphi 0, %s409
      %s426 = sphi 0, %s410
      %s430 = sphi 0, %s430
      %s432 = sphi 0, %s430
      %s433 = sphi 0, %s432
      %s447 = sphi 0, %s433
      %s451 = sphi 0, %s451
      %s453 = sphi 0, %s451
      %s454 = sphi 0, %s453
      %s468 = sphi 0, %s454
      %s472 = sphi 0, %s472
      %s474 = sphi 0, %s472
      %s475 = sphi 0, %s474
      %s489 = sphi 0, %s475
      %s495 = sphi 0, %s497
      %s498 = sphi 0, %s495
      %s499 = sphi 0, %s498
      %s515 = sphi 0, %s499
    $region4: #{tpu_custom_call.1} parent=1 // loop_header_branch
      %28 = sbr.rel (%p26) target = $region8
    $region5: #{tpu_custom_call.1} parent=1 // loop_body
      %s30 = ssub.s32 %s25, 1
      %s31 = ssub.s32 %s25, 2
      %s38 = sadd.s32 1, %s33
      %p39 = scmp.ge.s32.totalorder %s38, 2
      %s40 = scalar_select %p39, 0, %s38
      %s41 = sadd.s32 1, %s32
      %s42 = scalar_select %p39, %s41, %s32
      %p43 = scmp.ge.s32.totalorder %s42, 1
      %s44 = scalar_select %p43, 0, %s42
      %s45 = ssub.s32 %s32, %s44
      %p46 = scmp.eq.s32.totalorder %s45, 0
      %s48 = sadd.s32 %s47, 1
      %s49 = scalar_select %p46, %s47, %s48
      %p52 = pneg %p46
      %p53 = scmp.eq.s32.totalorder %s25, 1
      %p54 = por %p52, %p53
      %p55 = scmp.ne.s32.totalorder %s47, %s50
      %p56 = scmp.eq.s32.totalorder %s25, 0
      %p57 = por %p55, %p56
      %p58 = scmp.ne.s32.totalorder %s47, %s50
      %p59 = scmp.eq.s32.totalorder %s30, 1
      %p60 = por %p58, %p59
      %p61 = scmp.ne.s32.totalorder %s50, %s51
      %p62 = scmp.eq.s32.totalorder %s30, 0
      %p63 = por %p61, %p62
      %p64 = scmp.ne.s32.totalorder %s50, %s51
      %p65 = scmp.eq.s32.totalorder %s31, 1
      %p66 = por %p64, %p65
      %p68 = scmp.ne.s32.totalorder %s51, %s67
      %p69 = scmp.eq.s32.totalorder %s31, 0
      %p70 = por %p68, %p69
      %s71 = ssub.s32 %s32, %s44
      %p72 = scmp.eq.s32.totalorder %s71, 0
      %s74 = sadd.s32 %s73, 1
      %s75 = scalar_select %p72, %s73, %s74
      %p78 = pneg %p72
      %p79 = scmp.eq.s32.totalorder %s25, 1
      %p80 = por %p78, %p79
      %p81 = scmp.ne.s32.totalorder %s73, %s76
      %p82 = scmp.eq.s32.totalorder %s25, 0
      %p83 = por %p81, %p82
      %p84 = scmp.ne.s32.totalorder %s73, %s76
      %p85 = scmp.eq.s32.totalorder %s30, 1
      %p86 = por %p84, %p85
      %p87 = scmp.ne.s32.totalorder %s76, %s77
      %p88 = scmp.eq.s32.totalorder %s30, 0
      %p89 = por %p87, %p88
      %p90 = scmp.ne.s32.totalorder %s76, %s77
      %p91 = scmp.eq.s32.totalorder %s31, 1
      %p92 = por %p90, %p91
      %p94 = scmp.ne.s32.totalorder %s77, %s93
      %p95 = scmp.eq.s32.totalorder %s31, 0
      %p96 = por %p94, %p95
      %s98 = sadd.s32 %s97, 1
      %p101 = scmp.eq.s32.totalorder %s25, 1
      %p102 = scmp.ne.s32.totalorder %s97, %s99
      %p103 = scmp.eq.s32.totalorder %s25, 0
      %p104 = por %p102, %p103
      %p105 = scmp.ne.s32.totalorder %s97, %s99
      %p106 = scmp.eq.s32.totalorder %s30, 1
      %p107 = por %p105, %p106
      %p108 = scmp.ne.s32.totalorder %s99, %s100
      %p109 = scmp.eq.s32.totalorder %s30, 0
      %p110 = por %p108, %p109
      %p111 = scmp.ne.s32.totalorder %s99, %s100
      %p112 = scmp.eq.s32.totalorder %s31, 1
      %p113 = por %p111, %p112
      %p115 = scmp.ne.s32.totalorder %s100, %s114
      %p116 = scmp.eq.s32.totalorder %s31, 0
      %p117 = por %p115, %p116
      %s118 = ssub.s32 %s33, %s40
      %p119 = scmp.eq.s32.totalorder %s118, 0
      %s121 = sadd.s32 %s120, 1
      %s122 = scalar_select %p119, %s120, %s121
      %p125 = pneg %p119
      %p126 = scmp.eq.s32.totalorder %s25, 1
      %p127 = por %p125, %p126
      %p128 = scmp.ne.s32.totalorder %s120, %s123
      %p129 = scmp.eq.s32.totalorder %s25, 0
      %p130 = por %p128, %p129
      %p131 = scmp.ne.s32.totalorder %s120, %s123
      %p132 = scmp.eq.s32.totalorder %s30, 1
      %p133 = por %p131, %p132
      %p134 = scmp.ne.s32.totalorder %s123, %s124
      %p135 = scmp.eq.s32.totalorder %s30, 0
      %p136 = por %p134, %p135
      %p137 = scmp.ne.s32.totalorder %s123, %s124
      %p138 = scmp.eq.s32.totalorder %s31, 1
      %p139 = por %p137, %p138
      %p141 = scmp.ne.s32.totalorder %s124, %s140
      %p142 = scmp.eq.s32.totalorder %s31, 0
      %p143 = por %p141, %p142
      %s144 = ssub.s32 %s33, %s40
      %p145 = scmp.eq.s32.totalorder %s144, 0
      %s147 = sadd.s32 %s146, 1
      %s148 = scalar_select %p145, %s146, %s147
      %p151 = pneg %p145
      %p152 = scmp.eq.s32.totalorder %s25, 1
      %p153 = por %p151, %p152
      %p154 = scmp.ne.s32.totalorder %s146, %s149
      %p155 = scmp.eq.s32.totalorder %s25, 0
      %p156 = por %p154, %p155
      %p157 = scmp.ne.s32.totalorder %s146, %s149
      %p158 = scmp.eq.s32.totalorder %s30, 1
      %p159 = por %p157, %p158
      %p160 = scmp.ne.s32.totalorder %s149, %s150
      %p161 = scmp.eq.s32.totalorder %s30, 0
      %p162 = por %p160, %p161
      %p163 = scmp.ne.s32.totalorder %s149, %s150
      %p164 = scmp.eq.s32.totalorder %s31, 1
      %p165 = por %p163, %p164
      %p167 = scmp.ne.s32.totalorder %s150, %s166
      %p168 = scmp.eq.s32.totalorder %s31, 0
      %p169 = por %p167, %p168
      %s170 = ssub.s32 %s33, %s40
      %p171 = scmp.eq.s32.totalorder %s170, 0
      %s173 = sadd.s32 %s172, 1
      %s174 = scalar_select %p171, %s172, %s173
      %p177 = pneg %p171
      %p178 = scmp.eq.s32.totalorder %s25, 1
      %p179 = por %p177, %p178
      %p180 = scmp.ne.s32.totalorder %s172, %s175
      %p181 = scmp.eq.s32.totalorder %s25, 0
      %p182 = por %p180, %p181
      %p183 = scmp.ne.s32.totalorder %s172, %s175
      %p184 = scmp.eq.s32.totalorder %s30, 1
      %p185 = por %p183, %p184
      %p186 = scmp.ne.s32.totalorder %s175, %s176
      %p187 = scmp.eq.s32.totalorder %s30, 0
      %p188 = por %p186, %p187
      %p189 = scmp.ne.s32.totalorder %s175, %s176
      %p190 = scmp.eq.s32.totalorder %s31, 1
      %p191 = por %p189, %p190
      %p193 = scmp.ne.s32.totalorder %s176, %s192
      %p194 = scmp.eq.s32.totalorder %s31, 0
      %p195 = por %p193, %p194
      %s196 = ssub.s32 %s33, %s40
      %p197 = scmp.eq.s32.totalorder %s196, 0
      %s199 = sadd.s32 %s198, 1
      %s200 = scalar_select %p197, %s198, %s199
      %p203 = pneg %p197
      %p204 = scmp.eq.s32.totalorder %s25, 1
      %p205 = por %p203, %p204
      %p206 = scmp.ne.s32.totalorder %s198, %s201
      %p207 = scmp.eq.s32.totalorder %s25, 0
      %p208 = por %p206, %p207
      %p209 = scmp.ne.s32.totalorder %s198, %s201
      %p210 = scmp.eq.s32.totalorder %s30, 1
      %p211 = por %p209, %p210
      %p212 = scmp.ne.s32.totalorder %s201, %s202
      %p213 = scmp.eq.s32.totalorder %s30, 0
      %p214 = por %p212, %p213
      %p215 = scmp.ne.s32.totalorder %s201, %s202
      %p216 = scmp.eq.s32.totalorder %s31, 1
      %p217 = por %p215, %p216
      %p219 = scmp.ne.s32.totalorder %s202, %s218
      %p220 = scmp.eq.s32.totalorder %s31, 0
      %p221 = por %p219, %p220
      %s222 = ssub.s32 %s33, %s40
      %p223 = scmp.eq.s32.totalorder %s222, 0
      %s225 = sadd.s32 %s224, 1
      %s226 = scalar_select %p223, %s224, %s225
      %p229 = pneg %p223
      %p230 = scmp.eq.s32.totalorder %s25, 1
      %p231 = por %p229, %p230
      %p232 = scmp.ne.s32.totalorder %s224, %s227
      %p233 = scmp.eq.s32.totalorder %s25, 0
      %p234 = por %p232, %p233
      %p235 = scmp.ne.s32.totalorder %s224, %s227
      %p236 = scmp.eq.s32.totalorder %s30, 1
      %p237 = por %p235, %p236
      %p238 = scmp.ne.s32.totalorder %s227, %s228
      %p239 = scmp.eq.s32.totalorder %s30, 0
      %p240 = por %p238, %p239
      %p241 = scmp.ne.s32.totalorder %s227, %s228
      %p242 = scmp.eq.s32.totalorder %s31, 1
      %p243 = por %p241, %p242
      %p245 = scmp.ne.s32.totalorder %s228, %s244
      %p246 = scmp.eq.s32.totalorder %s31, 0
      %p247 = por %p245, %p246
      %s248 = ssub.s32 %s33, %s40
      %p249 = scmp.eq.s32.totalorder %s248, 0
      %s251 = sadd.s32 %s250, 1
      %s252 = scalar_select %p249, %s250, %s251
      %p255 = pneg %p249
      %p256 = scmp.eq.s32.totalorder %s25, 1
      %p257 = por %p255, %p256
      %p258 = scmp.ne.s32.totalorder %s250, %s253
      %p259 = scmp.eq.s32.totalorder %s25, 0
      %p260 = por %p258, %p259
      %p261 = scmp.ne.s32.totalorder %s250, %s253
      %p262 = scmp.eq.s32.totalorder %s30, 1
      %p263 = por %p261, %p262
      %p264 = scmp.ne.s32.totalorder %s253, %s254
      %p265 = scmp.eq.s32.totalorder %s30, 0
      %p266 = por %p264, %p265
      %p267 = scmp.ne.s32.totalorder %s253, %s254
      %p268 = scmp.eq.s32.totalorder %s31, 1
      %p269 = por %p267, %p268
      %p271 = scmp.ne.s32.totalorder %s254, %s270
      %p272 = scmp.eq.s32.totalorder %s31, 0
      %p273 = por %p271, %p272
      %s274 = ssub.s32 %s33, %s40
      %p275 = scmp.eq.s32.totalorder %s274, 0
      %s277 = sadd.s32 %s276, 1
      %s278 = scalar_select %p275, %s276, %s277
      %p281 = pneg %p275
      %p282 = scmp.eq.s32.totalorder %s25, 1
      %p283 = por %p281, %p282
      %p284 = scmp.ne.s32.totalorder %s276, %s279
      %p285 = scmp.eq.s32.totalorder %s25, 0
      %p286 = por %p284, %p285
      %p287 = scmp.ne.s32.totalorder %s276, %s279
      %p288 = scmp.eq.s32.totalorder %s30, 1
      %p289 = por %p287, %p288
      %p290 = scmp.ne.s32.totalorder %s279, %s280
      %p291 = scmp.eq.s32.totalorder %s30, 0
      %p292 = por %p290, %p291
      %p293 = scmp.ne.s32.totalorder %s279, %s280
      %p294 = scmp.eq.s32.totalorder %s31, 1
      %p295 = por %p293, %p294
      %p297 = scmp.ne.s32.totalorder %s280, %s296
      %p298 = scmp.eq.s32.totalorder %s31, 0
      %p299 = por %p297, %p298
      %s300 = ssub.s32 %s33, %s40
      %p301 = scmp.eq.s32.totalorder %s300, 0
      %s303 = sadd.s32 %s302, 1
      %s304 = scalar_select %p301, %s302, %s303
      %p307 = pneg %p301
      %p308 = scmp.eq.s32.totalorder %s25, 1
      %p309 = por %p307, %p308
      %p310 = scmp.ne.s32.totalorder %s302, %s305
      %p311 = scmp.eq.s32.totalorder %s25, 0
      %p312 = por %p310, %p311
      %p313 = scmp.ne.s32.totalorder %s302, %s305
      %p314 = scmp.eq.s32.totalorder %s30, 1
      %p315 = por %p313, %p314
      %p316 = scmp.ne.s32.totalorder %s305, %s306
      %p317 = scmp.eq.s32.totalorder %s30, 0
      %p318 = por %p316, %p317
      %p319 = scmp.ne.s32.totalorder %s305, %s306
      %p320 = scmp.eq.s32.totalorder %s31, 1
      %p321 = por %p319, %p320
      %p323 = scmp.ne.s32.totalorder %s306, %s322
      %p324 = scmp.eq.s32.totalorder %s31, 0
      %p325 = por %p323, %p324
      %s326 = ssub.s32 %s33, %s40
      %p327 = scmp.eq.s32.totalorder %s326, 0
      %s329 = sadd.s32 %s328, 1
      %s330 = scalar_select %p327, %s328, %s329
      %p333 = pneg %p327
      %p334 = scmp.eq.s32.totalorder %s25, 1
      %p335 = por %p333, %p334
      %p336 = scmp.ne.s32.totalorder %s328, %s331
      %p337 = scmp.eq.s32.totalorder %s25, 0
      %p338 = por %p336, %p337
      %p339 = scmp.ne.s32.totalorder %s328, %s331
      %p340 = scmp.eq.s32.totalorder %s30, 1
      %p341 = por %p339, %p340
      %p342 = scmp.ne.s32.totalorder %s331, %s332
      %p343 = scmp.eq.s32.totalorder %s30, 0
      %p344 = por %p342, %p343
      %p345 = scmp.ne.s32.totalorder %s331, %s332
      %p346 = scmp.eq.s32.totalorder %s31, 1
      %p347 = por %p345, %p346
      %p349 = scmp.ne.s32.totalorder %s332, %s348
      %p350 = scmp.eq.s32.totalorder %s31, 0
      %p351 = por %p349, %p350
      %s352 = ssub.s32 %s33, %s40
      %p353 = scmp.eq.s32.totalorder %s352, 0
      %s355 = sadd.s32 %s354, 1
      %s356 = scalar_select %p353, %s354, %s355
      %p359 = pneg %p353
      %p360 = scmp.eq.s32.totalorder %s25, 1
      %p361 = por %p359, %p360
      %p362 = scmp.ne.s32.totalorder %s354, %s357
      %p363 = scmp.eq.s32.totalorder %s25, 0
      %p364 = por %p362, %p363
      %p365 = scmp.ne.s32.totalorder %s354, %s357
      %p366 = scmp.eq.s32.totalorder %s30, 1
      %p367 = por %p365, %p366
      %p368 = scmp.ne.s32.totalorder %s357, %s358
      %p369 = scmp.eq.s32.totalorder %s30, 0
      %p370 = por %p368, %p369
      %p371 = scmp.ne.s32.totalorder %s357, %s358
      %p372 = scmp.eq.s32.totalorder %s31, 1
      %p373 = por %p371, %p372
      %p375 = scmp.ne.s32.totalorder %s358, %s374
      %p376 = scmp.eq.s32.totalorder %s31, 0
      %p377 = por %p375, %p376
      %s378 = ssub.s32 %s33, %s40
      %p379 = scmp.eq.s32.totalorder %s378, 0
      %s381 = sadd.s32 %s380, 1
      %s382 = scalar_select %p379, %s380, %s381
      %p385 = pneg %p379
      %p386 = scmp.eq.s32.totalorder %s25, 1
      %p387 = por %p385, %p386
      %p388 = scmp.ne.s32.totalorder %s380, %s383
      %p389 = scmp.eq.s32.totalorder %s25, 0
      %p390 = por %p388, %p389
      %p391 = scmp.ne.s32.totalorder %s380, %s383
      %p392 = scmp.eq.s32.totalorder %s30, 1
      %p393 = por %p391, %p392
      %p394 = scmp.ne.s32.totalorder %s383, %s384
      %p395 = scmp.eq.s32.totalorder %s30, 0
      %p396 = por %p394, %p395
      %p397 = scmp.ne.s32.totalorder %s383, %s384
      %p398 = scmp.eq.s32.totalorder %s31, 1
      %p399 = por %p397, %p398
      %p401 = scmp.ne.s32.totalorder %s384, %s400
      %p402 = scmp.eq.s32.totalorder %s31, 0
      %p403 = por %p401, %p402
      %s404 = ssub.s32 %s33, %s40
      %p405 = scmp.eq.s32.totalorder %s404, 0
      %s407 = sadd.s32 %s406, 1
      %s408 = scalar_select %p405, %s406, %s407
      %p411 = pneg %p405
      %p412 = scmp.eq.s32.totalorder %s25, 1
      %p413 = por %p411, %p412
      %p414 = scmp.ne.s32.totalorder %s406, %s409
      %p415 = scmp.eq.s32.totalorder %s25, 0
      %p416 = por %p414, %p415
      %p417 = scmp.ne.s32.totalorder %s406, %s409
      %p418 = scmp.eq.s32.totalorder %s30, 1
      %p419 = por %p417, %p418
      %p420 = scmp.ne.s32.totalorder %s409, %s410
      %p421 = scmp.eq.s32.totalorder %s30, 0
      %p422 = por %p420, %p421
      %p423 = scmp.ne.s32.totalorder %s409, %s410
      %p424 = scmp.eq.s32.totalorder %s31, 1
      %p425 = por %p423, %p424
      %p427 = scmp.ne.s32.totalorder %s410, %s426
      %p428 = scmp.eq.s32.totalorder %s31, 0
      %p429 = por %p427, %p428
      %s431 = sadd.s32 %s430, 1
      %p434 = scmp.eq.s32.totalorder %s25, 1
      %p435 = scmp.ne.s32.totalorder %s430, %s432
      %p436 = scmp.eq.s32.totalorder %s25, 0
      %p437 = por %p435, %p436
      %p438 = scmp.ne.s32.totalorder %s430, %s432
      %p439 = scmp.eq.s32.totalorder %s30, 1
      %p440 = por %p438, %p439
      %p441 = scmp.ne.s32.totalorder %s432, %s433
      %p442 = scmp.eq.s32.totalorder %s30, 0
      %p443 = por %p441, %p442
      %p444 = scmp.ne.s32.totalorder %s432, %s433
      %p445 = scmp.eq.s32.totalorder %s31, 1
      %p446 = por %p444, %p445
      %p448 = scmp.ne.s32.totalorder %s433, %s447
      %p449 = scmp.eq.s32.totalorder %s31, 0
      %p450 = por %p448, %p449
      %s452 = sadd.s32 %s451, 1
      %p455 = scmp.eq.s32.totalorder %s25, 1
      %p456 = scmp.ne.s32.totalorder %s451, %s453
      %p457 = scmp.eq.s32.totalorder %s25, 0
      %p458 = por %p456, %p457
      %p459 = scmp.ne.s32.totalorder %s451, %s453
      %p460 = scmp.eq.s32.totalorder %s30, 1
      %p461 = por %p459, %p460
      %p462 = scmp.ne.s32.totalorder %s453, %s454
      %p463 = scmp.eq.s32.totalorder %s30, 0
      %p464 = por %p462, %p463
      %p465 = scmp.ne.s32.totalorder %s453, %s454
      %p466 = scmp.eq.s32.totalorder %s31, 1
      %p467 = por %p465, %p466
      %p469 = scmp.ne.s32.totalorder %s454, %s468
      %p470 = scmp.eq.s32.totalorder %s31, 0
      %p471 = por %p469, %p470
      %s473 = sadd.s32 %s472, 1
      %p476 = scmp.eq.s32.totalorder %s25, 1
      %p477 = scmp.ne.s32.totalorder %s472, %s474
      %p478 = scmp.eq.s32.totalorder %s25, 0
      %p479 = por %p477, %p478
      %p480 = scmp.ne.s32.totalorder %s472, %s474
      %p481 = scmp.eq.s32.totalorder %s30, 1
      %p482 = por %p480, %p481
      %p483 = scmp.ne.s32.totalorder %s474, %s475
      %p484 = scmp.eq.s32.totalorder %s30, 0
      %p485 = por %p483, %p484
      %p486 = scmp.ne.s32.totalorder %s474, %s475
      %p487 = scmp.eq.s32.totalorder %s31, 1
      %p488 = por %p486, %p487
      %p490 = scmp.ne.s32.totalorder %s475, %s489
      %p491 = scmp.eq.s32.totalorder %s31, 0
      %p492 = por %p490, %p491
      %s493 = ssub.s32 %s32, %s44
      %p494 = scmp.eq.s32.totalorder %s493, 0
      %s496 = sadd.s32 %s495, 1
      %s497 = scalar_select %p494, %s495, %s496
      %p500 = pneg %p494
      %p501 = scmp.eq.s32.totalorder %s25, 1
      %p502 = por %p500, %p501
      %p503 = scmp.ne.s32.totalorder %s495, %s498
      %p504 = scmp.eq.s32.totalorder %s25, 0
      %p505 = por %p503, %p504
      %p506 = scmp.ne.s32.totalorder %s495, %s498
      %p507 = scmp.eq.s32.totalorder %s30, 1
      %p508 = por %p506, %p507
      %p509 = scmp.ne.s32.totalorder %s498, %s499
      %p510 = scmp.eq.s32.totalorder %s30, 0
      %p511 = por %p509, %p510
      %p512 = scmp.ne.s32.totalorder %s498, %s499
      %p513 = scmp.eq.s32.totalorder %s31, 1
      %p514 = por %p512, %p513
      %p516 = scmp.ne.s32.totalorder %s499, %s515
      %p517 = scmp.eq.s32.totalorder %s31, 0
      %p518 = por %p516, %p517
      %p519 = scmp.le.s32.totalorder 1, %s25
      %p520 = scmp.lt.s32.totalorder %s25, 3
      %p521 = pnand %p519, %p520
      %p522 = pneg %p521
      // Predicated region
      $region9: #{tpu_custom_call.1} parent=5 // pred_check
        _
      $region10: #{tpu_custom_call.1} parent=5 // pred_check_branch
        %524 = sbr.rel (%p521) target = $region12
      $region11: #{tpu_custom_call.1} parent=5 // pred_region
        %s525 = ssub.s32 %s25, 1
        // Predicated region
        $region13: #{tpu_custom_call.1} parent=11 // pred_check
          %p526 = pneg %p63
        $region14: #{tpu_custom_call.1} parent=11 // pred_check_branch
          %528 = sbr.rel (%p526) target = $region16
        $region15: #{tpu_custom_call.1} parent=11 // pred_region
          %s529 = smul.u32 2, %s34
          %p530 = scmp.lt.s32.totalorder %s529, 1
          %s531 = scalar_select %p530, %s529, 1
          %s532 = smul.addr %s531, 4
          %s533 = scalar_lea.vmem %s0, %s532
          %s534 = smul.u32 2, %s34
        $region16: #{tpu_custom_call.1} parent=11 // pred_fallthru
          _
        // Predicated region
        $region17: #{tpu_custom_call.1} parent=11 // pred_check
          %p535 = pneg %p89
        $region18: #{tpu_custom_call.1} parent=11 // pred_check_branch
          %537 = sbr.rel (%p535) target = $region20
        $region19: #{tpu_custom_call.1} parent=11 // pred_region
          %s538 = smul.u32 2, %s34
          %p539 = scmp.lt.s32.totalorder %s538, 1
          %s540 = scalar_select %p539, %s538, 1
          %s541 = smul.addr %s540, 8
          %s542 = scalar_lea.vmem %s1, %s541
          %s543 = smul.u32 2, %s34
        $region20: #{tpu_custom_call.1} parent=11 // pred_fallthru
          _
        // Predicated region
        $region21: #{tpu_custom_call.1} parent=11 // pred_check
          %p544 = pneg %p110
        $region22: #{tpu_custom_call.1} parent=11 // pred_check_branch
          %546 = sbr.rel (%p544) target = $region24
        $region23: #{tpu_custom_call.1} parent=11 // pred_region
          _
        $region24: #{tpu_custom_call.1} parent=11 // pred_fallthru
          _
        // Predicated region
        $region25: #{tpu_custom_call.1} parent=11 // pred_check
          %p547 = pneg %p443
        $region26: #{tpu_custom_call.1} parent=11 // pred_check_branch
          %549 = sbr.rel (%p547) target = $region28
        $region27: #{tpu_custom_call.1} parent=11 // pred_region
          _
        $region28: #{tpu_custom_call.1} parent=11 // pred_fallthru
          _
        // Predicated region
        $region29: #{tpu_custom_call.1} parent=11 // pred_check
          %p550 = pneg %p464
        $region30: #{tpu_custom_call.1} parent=11 // pred_check_branch
          %552 = sbr.rel (%p550) target = $region32
        $region31: #{tpu_custom_call.1} parent=11 // pred_region
          _
        $region32: #{tpu_custom_call.1} parent=11 // pred_fallthru
          _
        // Predicated region
        $region33: #{tpu_custom_call.1} parent=11 // pred_check
          %p553 = pneg %p485
        $region34: #{tpu_custom_call.1} parent=11 // pred_check_branch
          %555 = sbr.rel (%p553) target = $region36
        $region35: #{tpu_custom_call.1} parent=11 // pred_region
          _
        $region36: #{tpu_custom_call.1} parent=11 // pred_fallthru
          _
      $region12: #{tpu_custom_call.1} parent=5 // pred_fallthru
        _
      %p556 = scmp.lt.s32.totalorder %s25, 2
      // Predicated region
      $region37: #{tpu_custom_call.1} parent=5 // pred_check
        %p557 = pneg %p556
      $region38: #{tpu_custom_call.1} parent=5 // pred_check_branch
        %559 = sbr.rel (%p557) target = $region40
      $region39: #{tpu_custom_call.1} parent=5 // pred_region
        // Predicated region
        $region41: #{tpu_custom_call.1} parent=39 // pred_check
          %p560 = pneg %p130
        $region42: #{tpu_custom_call.1} parent=39 // pred_check_branch
          %562 = sbr.rel (%p560) target = $region44
        $region43: #{tpu_custom_call.1} parent=39 // pred_region
          %p563 = scmp.lt.s32.totalorder %s33, 1
          %s564 = scalar_select %p563, %s33, 1
          %s565 = scalar_lea.vmem %s3, %s564
        $region44: #{tpu_custom_call.1} parent=39 // pred_fallthru
          _
        // Predicated region
        $region45: #{tpu_custom_call.1} parent=39 // pred_check
          %p566 = pneg %p156
        $region46: #{tpu_custom_call.1} parent=39 // pred_check_branch
          %568 = sbr.rel (%p566) target = $region48
        $region47: #{tpu_custom_call.1} parent=39 // pred_region
          %p569 = scmp.lt.s32.totalorder %s33, 1
          %s570 = scalar_select %p569, %s33, 1
          %s571 = scalar_lea.vmem %s4, %s570
        $region48: #{tpu_custom_call.1} parent=39 // pred_fallthru
          _
        // Predicated region
        $region49: #{tpu_custom_call.1} parent=39 // pred_check
          %p572 = pneg %p182
        $region50: #{tpu_custom_call.1} parent=39 // pred_check_branch
          %574 = sbr.rel (%p572) target = $region52
        $region51: #{tpu_custom_call.1} parent=39 // pred_region
          %p575 = scmp.lt.s32.totalorder %s33, 1
          %s576 = scalar_select %p575, %s33, 1
          %s577 = smul.addr %s576, 16
          %s578 = smul.addr %s577, 4
          %s579 = scalar_lea.vmem %s5, %s578
        $region52: #{tpu_custom_call.1} parent=39 // pred_fallthru
          _
        // Predicated region
        $region53: #{tpu_custom_call.1} parent=39 // pred_check
          %p580 = pneg %p208
        $region54: #{tpu_custom_call.1} parent=39 // pred_check_branch
          %582 = sbr.rel (%p580) target = $region56
        $region55: #{tpu_custom_call.1} parent=39 // pred_region
          %p583 = scmp.lt.s32.totalorder %s33, 1
          %s584 = scalar_select %p583, %s33, 1
          %s585 = smul.addr %s584, 2
          %s586 = scalar_lea.vmem %s6, %s585
        $region56: #{tpu_custom_call.1} parent=39 // pred_fallthru
          _
        // Predicated region
        $region57: #{tpu_custom_call.1} parent=39 // pred_check
          %p587 = pneg %p234
        $region58: #{tpu_custom_call.1} parent=39 // pred_check_branch
          %589 = sbr.rel (%p587) target = $region60
        $region59: #{tpu_custom_call.1} parent=39 // pred_region
          %p590 = scmp.lt.s32.totalorder %s33, 1
          %s591 = scalar_select %p590, %s33, 1
          %s592 = smul.addr %s591, 8
          %s593 = smul.addr %s592, 4
          %s594 = scalar_lea.vmem %s7, %s593
        $region60: #{tpu_custom_call.1} parent=39 // pred_fallthru
          _
        // Predicated region
        $region61: #{tpu_custom_call.1} parent=39 // pred_check
          %p595 = pneg %p260
        $region62: #{tpu_custom_call.1} parent=39 // pred_check_branch
          %597 = sbr.rel (%p595) target = $region64
        $region63: #{tpu_custom_call.1} parent=39 // pred_region
          %p598 = scmp.lt.s32.totalorder %s33, 1
          %s599 = scalar_select %p598, %s33, 1
          %s600 = scalar_lea.vmem %s8, %s599
        $region64: #{tpu_custom_call.1} parent=39 // pred_fallthru
          _
        // Predicated region
        $region65: #{tpu_custom_call.1} parent=39 // pred_check
          %p601 = pneg %p286
        $region66: #{tpu_custom_call.1} parent=39 // pred_check_branch
          %603 = sbr.rel (%p601) target = $region68
        $region67: #{tpu_custom_call.1} parent=39 // pred_region
          %p604 = scmp.lt.s32.totalorder %s33, 1
          %s605 = scalar_select %p604, %s33, 1
          %s606 = scalar_lea.vmem %s9, %s605
        $region68: #{tpu_custom_call.1} parent=39 // pred_fallthru
          _
        // Predicated region
        $region69: #{tpu_custom_call.1} parent=39 // pred_check
          %p607 = pneg %p312
        $region70: #{tpu_custom_call.1} parent=39 // pred_check_branch
          %609 = sbr.rel (%p607) target = $region72
        $region71: #{tpu_custom_call.1} parent=39 // pred_region
          %p610 = scmp.lt.s32.totalorder %s33, 1
          %s611 = scalar_select %p610, %s33, 1
          %s612 = scalar_lea.vmem %s10, %s611
        $region72: #{tpu_custom_call.1} parent=39 // pred_fallthru
          _
        // Predicated region
        $region73: #{tpu_custom_call.1} parent=39 // pred_check
          %p613 = pneg %p338
        $region74: #{tpu_custom_call.1} parent=39 // pred_check_branch
          %615 = sbr.rel (%p613) target = $region76
        $region75: #{tpu_custom_call.1} parent=39 // pred_region
          %p616 = scmp.lt.s32.totalorder %s33, 1
          %s617 = scalar_select %p616, %s33, 1
          %s618 = smul.addr %s617, 16
          %s619 = smul.addr %s618, 4
          %s620 = scalar_lea.vmem %s11, %s619
        $region76: #{tpu_custom_call.1} parent=39 // pred_fallthru
          _
        // Predicated region
        $region77: #{tpu_custom_call.1} parent=39 // pred_check
          %p621 = pneg %p364
        $region78: #{tpu_custom_call.1} parent=39 // pred_check_branch
          %623 = sbr.rel (%p621) target = $region80
        $region79: #{tpu_custom_call.1} parent=39 // pred_region
          %p624 = scmp.lt.s32.totalorder %s33, 1
          %s625 = scalar_select %p624, %s33, 1
          %s626 = smul.addr %s625, 2
          %s627 = scalar_lea.vmem %s12, %s626
        $region80: #{tpu_custom_call.1} parent=39 // pred_fallthru
          _
        // Predicated region
        $region81: #{tpu_custom_call.1} parent=39 // pred_check
          %p628 = pneg %p390
        $region82: #{tpu_custom_call.1} parent=39 // pred_check_branch
          %630 = sbr.rel (%p628) target = $region84
        $region83: #{tpu_custom_call.1} parent=39 // pred_region
          %p631 = scmp.lt.s32.totalorder %s33, 1
          %s632 = scalar_select %p631, %s33, 1
          %s633 = smul.addr %s632, 32
          %s634 = smul.addr %s633, 4
          %s635 = scalar_lea.vmem %s13, %s634
        $region84: #{tpu_custom_call.1} parent=39 // pred_fallthru
          _
        // Predicated region
        $region85: #{tpu_custom_call.1} parent=39 // pred_check
          %p636 = pneg %p416
        $region86: #{tpu_custom_call.1} parent=39 // pred_check_branch
          %638 = sbr.rel (%p636) target = $region88
        $region87: #{tpu_custom_call.1} parent=39 // pred_region
          %p639 = scmp.lt.s32.totalorder %s33, 1
          %s640 = scalar_select %p639, %s33, 1
          %s641 = scalar_lea.vmem %s14, %s640
        $region88: #{tpu_custom_call.1} parent=39 // pred_fallthru
          _
      $region40: #{tpu_custom_call.1} parent=5 // pred_fallthru
        _
      %p642 = scmp.le.s32.totalorder 1, %s25
      %p643 = scmp.lt.s32.totalorder %s25, 3
      %p644 = pnand %p642, %p643
      %p645 = pneg %p644
      // Predicated region
      $region89: #{tpu_custom_call.1} parent=5 // pred_check
        _
      $region90: #{tpu_custom_call.1} parent=5 // pred_check_branch
        %647 = sbr.rel (%p644) target = $region92
      $region91: #{tpu_custom_call.1} parent=5 // pred_region
        %s648 = ssub.s32 %s25, 1
        %s649 = smul.u32 2, %s34
        %p650 = scmp.lt.s32.totalorder %s649, 1
        %s651 = scalar_select %p650, %s649, 1
        %s652 = smul.addr %s651, 4
        %s653 = scalar_lea.vmem %s0, %s652
        %p654 = pneg %p63
        %p655 = pneg %p60
        %s656 = smul.u32 2, %s34
        %p657 = scmp.lt.s32.totalorder %s656, 1
        %s658 = scalar_select %p657, %s656, 1
        %s659 = smul.addr %s658, 8
        %s660 = scalar_lea.vmem %s1, %s659
        %p661 = pneg %p89
        %p662 = pneg %p86
        %p663 = pneg %p110
        %p664 = pneg %p107
        %p665 = scmp.lt.s32.totalorder %s35, 1
        %s666 = scalar_select %p665, %s35, 1
        %s667 = scalar_lea.vmem %s3, %s666
        %p668 = pneg %p136
        %p669 = pneg %p133
        %p670 = scmp.lt.s32.totalorder %s35, 1
        %s671 = scalar_select %p670, %s35, 1
        %s672 = scalar_lea.vmem %s4, %s671
        %p673 = pneg %p162
        %p674 = pneg %p159
        %p675 = scmp.lt.s32.totalorder %s35, 1
        %s676 = scalar_select %p675, %s35, 1
        %s677 = smul.addr %s676, 16
        %s678 = smul.addr %s677, 4
        %s679 = scalar_lea.vmem %s5, %s678
        %p680 = pneg %p188
        %p681 = pneg %p185
        %p682 = scmp.lt.s32.totalorder %s35, 1
        %s683 = scalar_select %p682, %s35, 1
        %s684 = smul.addr %s683, 2
        %s685 = scalar_lea.vmem %s6, %s684
        %p686 = pneg %p214
        %p687 = pneg %p211
        %p688 = scmp.lt.s32.totalorder %s35, 1
        %s689 = scalar_select %p688, %s35, 1
        %s690 = smul.addr %s689, 8
        %s691 = smul.addr %s690, 4
        %s692 = scalar_lea.vmem %s7, %s691
        %p693 = pneg %p240
        %p694 = pneg %p237
        %p695 = scmp.lt.s32.totalorder %s35, 1
        %s696 = scalar_select %p695, %s35, 1
        %s697 = scalar_lea.vmem %s8, %s696
        %p698 = pneg %p266
        %p699 = pneg %p263
        %p700 = scmp.lt.s32.totalorder %s35, 1
        %s701 = scalar_select %p700, %s35, 1
        %s702 = scalar_lea.vmem %s9, %s701
        %p703 = pneg %p292
        %p704 = pneg %p289
        %p705 = scmp.lt.s32.totalorder %s35, 1
        %s706 = scalar_select %p705, %s35, 1
        %s707 = scalar_lea.vmem %s10, %s706
        %p708 = pneg %p318
        %p709 = pneg %p315
        %p710 = scmp.lt.s32.totalorder %s35, 1
        %s711 = scalar_select %p710, %s35, 1
        %s712 = smul.addr %s711, 16
        %s713 = smul.addr %s712, 4
        %s714 = scalar_lea.vmem %s11, %s713
        %p715 = pneg %p344
        %p716 = pneg %p341
        %p717 = scmp.lt.s32.totalorder %s35, 1
        %s718 = scalar_select %p717, %s35, 1
        %s719 = smul.addr %s718, 2
        %s720 = scalar_lea.vmem %s12, %s719
        %p721 = pneg %p370
        %p722 = pneg %p367
        %p723 = scmp.lt.s32.totalorder %s35, 1
        %s724 = scalar_select %p723, %s35, 1
        %s725 = smul.addr %s724, 32
        %s726 = smul.addr %s725, 4
        %s727 = scalar_lea.vmem %s13, %s726
        %p728 = pneg %p396
        %p729 = pneg %p393
        %p730 = scmp.lt.s32.totalorder %s35, 1
        %s731 = scalar_select %p730, %s35, 1
        %s732 = scalar_lea.vmem %s14, %s731
        %p733 = pneg %p422
        %p734 = pneg %p419
        %p735 = pneg %p443
        %p736 = pneg %p440
        %p737 = pneg %p464
        %p738 = pneg %p461
        %p739 = pneg %p485
        %p740 = pneg %p482
        %p741 = pneg %p511
        %p742 = pneg %p508
        %s743 = smul.u32 2, %s34
        %p744 = scmp.lt.s32.totalorder %s743, 1
        %s745 = scalar_select %p744, %s743, 1
        %s746 = smul.addr %s745, 4
        %s747 = scalar_lea.vmem %s0, %s746
        %s748 = smul.u32 2, %s34
        %s749 = smul.u32 2, %s34
        %p750 = scmp.lt.s32.totalorder %s749, 1
        %s751 = scalar_select %p750, %s749, 1
        %s752 = smul.addr %s751, 8
        %s753 = scalar_lea.vmem %s1, %s752
        %s754 = smul.u32 2, %s34
        %p755 = scmp.lt.s32.totalorder %s35, 1
        %s756 = scalar_select %p755, %s35, 1
        %s757 = scalar_lea.vmem %s3, %s756
        %p758 = scmp.lt.s32.totalorder %s35, 1
        %s759 = scalar_select %p758, %s35, 1
        %s760 = scalar_lea.vmem %s4, %s759
        %p761 = scmp.lt.s32.totalorder %s35, 1
        %s762 = scalar_select %p761, %s35, 1
        %s763 = smul.addr %s762, 16
        %s764 = smul.addr %s763, 4
        %s765 = scalar_lea.vmem %s5, %s764
        %p766 = scmp.lt.s32.totalorder %s35, 1
        %s767 = scalar_select %p766, %s35, 1
        %s768 = smul.addr %s767, 2
        %s769 = scalar_lea.vmem %s6, %s768
        %p770 = scmp.lt.s32.totalorder %s35, 1
        %s771 = scalar_select %p770, %s35, 1
        %s772 = smul.addr %s771, 8
        %s773 = smul.addr %s772, 4
        %s774 = scalar_lea.vmem %s7, %s773
        %p775 = scmp.lt.s32.totalorder %s35, 1
        %s776 = scalar_select %p775, %s35, 1
        %s777 = scalar_lea.vmem %s8, %s776
        %p778 = scmp.lt.s32.totalorder %s35, 1
        %s779 = scalar_select %p778, %s35, 1
        %s780 = scalar_lea.vmem %s9, %s779
        %p781 = scmp.lt.s32.totalorder %s35, 1
        %s782 = scalar_select %p781, %s35, 1
        %s783 = scalar_lea.vmem %s10, %s782
        %p784 = scmp.lt.s32.totalorder %s35, 1
        %s785 = scalar_select %p784, %s35, 1
        %s786 = smul.addr %s785, 16
        %s787 = smul.addr %s786, 4
        %s788 = scalar_lea.vmem %s11, %s787
        %p789 = scmp.lt.s32.totalorder %s35, 1
        %s790 = scalar_select %p789, %s35, 1
        %s791 = smul.addr %s790, 2
        %s792 = scalar_lea.vmem %s12, %s791
        %p793 = scmp.lt.s32.totalorder %s35, 1
        %s794 = scalar_select %p793, %s35, 1
        %s795 = smul.addr %s794, 32
        %s796 = smul.addr %s795, 4
        %s797 = scalar_lea.vmem %s13, %s796
        %p798 = scmp.lt.s32.totalorder %s35, 1
        %s799 = scalar_select %p798, %s35, 1
        %s800 = scalar_lea.vmem %s14, %s799
        %s801 = smul.u32 2, %s34
        %p803 = scmp.eq.s32.totalorder %s35, 0
        // Predicated region
        $region93: #{tpu_custom_call.1} parent=91 // pred_check
          %p804 = pneg %p803
        $region94: #{tpu_custom_call.1} parent=91 // pred_check_branch
          %806 = sbr.rel (%p804) target = $region96
        $region95: #{tpu_custom_call.1} parent=91 // pred_region
          %v807 = vld [vmem:[%s747] sm:$0xf]
          %v808 = vld [vmem:[%s747 + $0x4] sm:$0xf]
          %v809 = vunpack.c.l.bf16 %v807
          %v810 = vunpack.c.l.bf16 %v808
          %vm811 = vcmask 523264
          %812 = vst.msk [vmem:[#allocation2] sm:$0xff] %vm811, %v809
          %813 = vst.msk [vmem:[#allocation2 + $0x8] sm:$0xff] %vm811, %v810
        $region96: #{tpu_custom_call.1} parent=91 // pred_fallthru
          _
        %v814 = vld [vmem:[#allocation2] sm:$0xff]
        %v815 = vld [vmem:[#allocation2 + $0x8] sm:$0xff]
        %v816 = vld [vmem:[%s757] sm:$0x1]
        %v817 = vld [vmem:[%s760] sm:$0x1]
        %vm818 = vcmask 523264
        %v819 = vsel %vm818, %v814, 0.0
        %820 = vadd.xlane.f32.xlu0 %v819
        %v821 = vpop.xlane.xlu0 %820
        %v822 = vsel %vm818, %v815, 0.0
        %823 = vadd.xlane.f32.xlu0 %v822
        %v824 = vpop.xlane.xlu0 %823
        %v825 = vrcp.pop 64.0
        %v826 = vmul.f32 %v821, %v825
        %v827 = vmul.f32 %v824, %v825
        %v828 = vsub.f32 %v814, %v826
        %v829 = vsub.f32 %v815, %v827
        %v830 = vmul.f32 %v828, %v828
        %v831 = vmul.f32 %v829, %v829
        %v832 = vsel %vm818, %v830, 0.0
        %833 = vadd.xlane.f32.xlu0 %v832
        %v834 = vpop.xlane.xlu0 %833
        %v835 = vsel %vm818, %v831, 0.0
        %836 = vadd.xlane.f32.xlu0 %v835
        %v837 = vpop.xlane.xlu0 %836
        %v838 = vmul.f32 %v834, %v825
        %v839 = vmul.f32 %v837, %v825
        %v840 = vadd.f32 %v838, 1e-05
        %v841 = vadd.f32 %v839, 1e-05
        %v842 = vrsqrt.pop %v840
        %v843 = vrsqrt.pop %v841
        %v844 = vmul.f32 %v828, %v842
        %v845 = vmul.f32 %v829, %v843
        %v847 = vlaneseq
        %v848 = vshrl.u32 %v847, 7
        %v849 = vsub.s32 0, %v848
        %v850 = vrot.slane %v816, %v849
        %v852 = vmul.f32 %v844, %v850
        %v853 = vmul.f32 %v845, %v850
        %v855 = vlaneseq
        %v856 = vshrl.u32 %v855, 7
        %v857 = vsub.s32 0, %v856
        %v858 = vrot.slane %v817, %v857
        %v860 = vadd.f32 %v852, %v858
        %v861 = vadd.f32 %v853, %v858
        %v862 = vpack.c.bf16 %v861, %v860
        %v863 = vld [vmem:[%s765] sm:$0xff]
        %v864 = vld [vmem:[%s765 + $0x8] sm:$0xff]
        %v865 = vld [vmem:[%s765 + $0x10] sm:$0xff]
        %v866 = vld [vmem:[%s765 + $0x18] sm:$0xff]
        %v867 = vld [vmem:[%s765 + $0x20] sm:$0xff]
        %v868 = vld [vmem:[%s765 + $0x28] sm:$0xff]
        %v869 = vld [vmem:[%s765 + $0x30] sm:$0xff]
        %v870 = vld [vmem:[%s765 + $0x38] sm:$0xff]
        %v871 = vld [vmem:[%s769] sm:$0x3]
        %v873 = vlaneseq
        %v874 = vshrl.u32 %v873, 7
        %v875 = vsub.s32 0, %v874
        %v876 = vrot.slane %v871, %v875
        %v877 = vlaneseq
        %v878 = vshrl.u32 %v877, 7
        %v879 = vsub.s32 1, %v878
        %v880 = vrot.slane %v871, %v879
        %v891 = vunpack.c.l.b16 %v863
        %v892 = vunpack.c.h.b16 %v863
        %v893 = vunpack.c.l.b16 %v864
        %v894 = vunpack.c.h.b16 %v864
        %v895 = vunpack.c.l.b16 %v865
        %v896 = vunpack.c.h.b16 %v865
        %v897 = vunpack.c.l.b16 %v866
        %v898 = vunpack.c.h.b16 %v866
        %v899 = vunpack.c.l.b16 %v867
        %v900 = vunpack.c.h.b16 %v867
        %v901 = vunpack.c.l.b16 %v868
        %v902 = vunpack.c.h.b16 %v868
        %v903 = vunpack.c.l.b16 %v869
        %v904 = vunpack.c.h.b16 %v869
        %v905 = vunpack.c.l.b16 %v870
        %v906 = vunpack.c.h.b16 %v870
        %v907 = vpack.c.b16 %v893, %v891
        %v908 = vpack.c.b16 %v894, %v892
        %v909 = vpack.c.b16 %v897, %v895
        %v910 = vpack.c.b16 %v898, %v896
        %v911 = vpack.c.b16 %v901, %v899
        %v912 = vpack.c.b16 %v902, %v900
        %v913 = vpack.c.b16 %v905, %v903
        %v914 = vpack.c.b16 %v906, %v904
        %v924 = vsel %vm818, %v862, 0
        %926 = vmatprep.subr.bf16.mxu0 %v908
        %927 = vmatpush1.bf16.msra.mxu0 %v907
        %928 = vmatprep.subr.bf16.mxu0 %v910
        %929 = vmatpush1.bf16.msra.mxu0 %v909
        %930 = vmatprep.subr.bf16.mxu0 %v912
        %931 = vmatpush1.bf16.msra.mxu0 %v911
        %932 = vmatprep.subr.bf16.mxu0 %v914
        %933 = vmatpush1.bf16.msra.mxu0 %v913
        %934 = vmatprep.subr.bf16.mxu0 0
        %935 = vmatpush1.bf16.msra.mxu0 0
        %936 = vmatprep.subr.bf16.mxu0 0
        %937 = vmatpush1.bf16.msra.mxu0 0
        %938 = vmatprep.subr.bf16.mxu0 0
        %939 = vmatpush1.bf16.msra.mxu0 0
        %940 = vmatprep.subr.bf16.mxu0 0
        %941 = vmatpush1.bf16.msra.mxu0 0
        %942 = vmatprep.subr.bf16.mxu0 0
        %943 = vmatpush1.bf16.msra.mxu0 0
        %944 = vmatprep.subr.bf16.mxu0 0
        %945 = vmatpush1.bf16.msra.mxu0 0
        %946 = vmatprep.subr.bf16.mxu0 0
        %947 = vmatpush1.bf16.msra.mxu0 0
        %948 = vmatprep.subr.bf16.mxu0 0
        %949 = vmatpush1.bf16.msra.mxu0 0
        %950 = vmatprep.subr.bf16.mxu0 0
        %951 = vmatpush1.bf16.msra.mxu0 0
        %952 = vmatprep.subr.bf16.mxu0 0
        %953 = vmatpush1.bf16.msra.mxu0 0
        %954 = vmatprep.subr.bf16.mxu0 0
        %955 = vmatpush1.bf16.msra.mxu0 0
        %956 = vmatprep.subr.bf16.mxu0 0
        %957 = vmatpush1.bf16.msra.mxu0 0
        %958 = vmatprep.mubr.bf16.mxu0 0
        %959 = vmatmul.mubr.bf16.gmra.mrb[0].mxu0 %v924
        %v960 = vpop.f32.mrb[0].mxu0
        %v961 = vadd.f32 %v876, %v960
        %v962 = vpop.f32.mrb[0].mxu0
        %v963 = vadd.f32 %v880, %v962
        %v964 = vpop.f32.mrb[0].mxu0
        %v965 = vadd.f32 %v876, %v964
        %v966 = vpop.f32.mrb[0].mxu0
        %v967 = vadd.f32 %v880, %v966
        %968 = vdwg.mxu0
        %v969 = vpack.c.bf16 %v965, %v961
        %v970 = vpack.c.bf16 %v967, %v963
        %v971 = vld [vmem:[%s2] sm:$0xff]
        %v973 = vunpack.c.l.b16 %v969
        %v974 = vunpack.c.h.b16 %v969
        %v975 = vpack.c.b16 %v973, %v973
        %v976 = vpack.c.b16 %v974, %v974
        %v978 = vunpack.c.l.b16 %v970
        %v979 = vunpack.c.h.b16 %v970
        %v980 = vpack.c.b16 %v978, %v978
        %v981 = vpack.c.b16 %v979, %v979
        %982 = vrot.lane.b32.xlu0 %v975, 64
        %v983 = vpop.permute.xlu0 %982
        %vm984 = vcmask 261120
        %v986 = vsel %vm984, %v975, 0
        %v989 = vsel %vm984, %v983, 0
        %991 = vmatprep.subr.bf16.mxu0 0
        %992 = vmatpush1.bf16.xpose.msra.mxu0 %v989
        %993 = vmatprep.subr.bf16.mxu0 0
        %994 = vmatpush1.bf16.xpose.msra.mxu0 0
        %995 = vmatprep.subr.bf16.mxu0 0
        %996 = vmatpush1.bf16.xpose.msra.mxu0 0
        %997 = vmatprep.subr.bf16.mxu0 0
        %998 = vmatpush1.bf16.xpose.msra.mxu0 0
        %999 = vmatprep.subr.bf16.mxu0 0
        %1000 = vmatpush1.bf16.xpose.msra.mxu0 0
        %1001 = vmatprep.subr.bf16.mxu0 0
        %1002 = vmatpush1.bf16.xpose.msra.mxu0 0
        %1003 = vmatprep.subr.bf16.mxu0 0
        %1004 = vmatpush1.bf16.xpose.msra.mxu0 0
        %1005 = vmatprep.subr.bf16.mxu0 0
        %1006 = vmatpush1.bf16.xpose.msra.mxu0 0
        %1007 = vmatprep.subr.bf16.mxu0 0
        %1008 = vmatpush1.bf16.xpose.msra.mxu0 0
        %1009 = vmatprep.subr.bf16.mxu0 0
        %1010 = vmatpush1.bf16.xpose.msra.mxu0 0
        %1011 = vmatprep.subr.bf16.mxu0 0
        %1012 = vmatpush1.bf16.xpose.msra.mxu0 0
        %1013 = vmatprep.subr.bf16.mxu0 0
        %1014 = vmatpush1.bf16.xpose.msra.mxu0 0
        %1015 = vmatprep.subr.bf16.mxu0 0
        %1016 = vmatpush1.bf16.xpose.msra.mxu0 0
        %1017 = vmatprep.subr.bf16.mxu0 0
        %1018 = vmatpush1.bf16.xpose.msra.mxu0 0
        %1019 = vmatprep.subr.bf16.mxu0 0
        %1020 = vmatpush1.bf16.xpose.msra.mxu0 0
        %1021 = vmatprep.subr.bf16.mxu0 0
        %1022 = vmatpush1.bf16.xpose.msra.mxu0 0
        %1023 = vmatprep.mubr.bf16.mxu0 0
        %1024 = vmatmul.mubr.bf16.gmra.mrb[0].mxu0 %v986
        %v1025 = vpop.f32.mrb[0].mxu0
        %v1026 = vadd.f32 %v971, %v1025
        %v1027 = vpop.f32.mrb[0].mxu0
        %v1028 = vpop.f32.mrb[0].mxu0
        %v1029 = vpop.f32.mrb[0].mxu0
        %1030 = vdwg.mxu0
        %1031 = vrot.lane.b32.xlu0 %v976, 64
        %v1032 = vpop.permute.xlu0 %1031
        %v1034 = vsel %vm984, %v976, 0
        %v1037 = vsel %vm984, %v1032, 0
        %1039 = vmatprep.subr.bf16.mxu0 0
        %1040 = vmatpush1.bf16.xpose.msra.mxu0 %v1037
        %1041 = vmatprep.subr.bf16.mxu0 0
        %1042 = vmatpush1.bf16.xpose.msra.mxu0 0
        %1043 = vmatprep.subr.bf16.mxu0 0
        %1044 = vmatpush1.bf16.xpose.msra.mxu0 0
        %1045 = vmatprep.subr.bf16.mxu0 0
        %1046 = vmatpush1.bf16.xpose.msra.mxu0 0
        %1047 = vmatprep.subr.bf16.mxu0 0
        %1048 = vmatpush1.bf16.xpose.msra.mxu0 0
        %1049 = vmatprep.subr.bf16.mxu0 0
        %1050 = vmatpush1.bf16.xpose.msra.mxu0 0
        %1051 = vmatprep.subr.bf16.mxu0 0
        %1052 = vmatpush1.bf16.xpose.msra.mxu0 0
        %1053 = vmatprep.subr.bf16.mxu0 0
        %1054 = vmatpush1.bf16.xpose.msra.mxu0 0
        %1055 = vmatprep.subr.bf16.mxu0 0
        %1056 = vmatpush1.bf16.xpose.msra.mxu0 0
        %1057 = vmatprep.subr.bf16.mxu0 0
        %1058 = vmatpush1.bf16.xpose.msra.mxu0 0
        %1059 = vmatprep.subr.bf16.mxu0 0
        %1060 = vmatpush1.bf16.xpose.msra.mxu0 0
        %1061 = vmatprep.subr.bf16.mxu0 0
        %1062 = vmatpush1.bf16.xpose.msra.mxu0 0
        %1063 = vmatprep.subr.bf16.mxu0 0
        %1064 = vmatpush1.bf16.xpose.msra.mxu0 0
        %1065 = vmatprep.subr.bf16.mxu0 0
        %1066 = vmatpush1.bf16.xpose.msra.mxu0 0
        %1067 = vmatprep.subr.bf16.mxu0 0
        %1068 = vmatpush1.bf16.xpose.msra.mxu0 0
        %1069 = vmatprep.subr.bf16.mxu0 0
        %1070 = vmatpush1.bf16.xpose.msra.mxu0 0
        %1071 = vmatprep.mubr.bf16.mxu0 0
        %1072 = vmatmul.mubr.bf16.gmra.mrb[0].mxu0 %v1034
        %v1073 = vpop.f32.mrb[0].mxu0
        %v1074 = vadd.f32 %v971, %v1073
        %v1075 = vpop.f32.mrb[0].mxu0
        %v1076 = vpop.f32.mrb[0].mxu0
        %v1077 = vpop.f32.mrb[0].mxu0
        %1078 = vdwg.mxu0
        %vm1079 = vcmask 64512
        %v1080 = vsel %vm1079, %v1026, -inf
        %1081 = vmax.xlane.f32.xlu0 %v1080
        %v1082 = vpop.xlane.xlu0 %1081
        %v1083 = vsel %vm1079, %v1074, -inf
        %1084 = vmax.xlane.f32.xlu0 %v1083
        %v1085 = vpop.xlane.xlu0 %1084
        %v1086 = vsub.f32 %v1026, %v1082
        %v1087 = vsub.f32 %v1074, %v1085
        %v1088 = vmul.f32 %v1086, 1.442695
        %v1089 = vpow.pop %v1088
        %v1090 = vmul.f32 %v1087, 1.442695
        %v1091 = vpow.pop %v1090
        %v1092 = vsel %vm1079, %v1089, 0.0
        %1093 = vadd.xlane.f32.xlu0 %v1092
        %v1094 = vpop.xlane.xlu0 %1093
        %v1095 = vsel %vm1079, %v1091, 0.0
        %1096 = vadd.xlane.f32.xlu0 %v1095
        %v1097 = vpop.xlane.xlu0 %1096
        %v1098 = vrcp.pop %v1094
        %v1099 = vrcp.pop %v1097
        %v1100 = vmul.f32 %v1089, %v1098
        %v1101 = vmul.f32 %v1091, %v1099
        %v1102 = vpack.c.bf16 %v1100, %v1100
        %v1103 = vpack.c.bf16 %v1101, %v1101
        %v1105 = vsel %vm1079, %v1102, 0
        %vm1107 = vcmask 1043456
        %v1109 = vsel %vm1107, %v980, 0
        %1111 = vmatprep.subr.bf16.mxu0 0
        %1112 = vmatpush1.bf16.msra.mxu0 %v1109
        %1113 = vmatprep.subr.bf16.mxu0 0
        %1114 = vmatpush1.bf16.msra.mxu0 0
        %1115 = vmatprep.subr.bf16.mxu0 0
        %1116 = vmatpush1.bf16.msra.mxu0 0
        %1117 = vmatprep.subr.bf16.mxu0 0
        %1118 = vmatpush1.bf16.msra.mxu0 0
        %1119 = vmatprep.subr.bf16.mxu0 0
        %1120 = vmatpush1.bf16.msra.mxu0 0
        %1121 = vmatprep.subr.bf16.mxu0 0
        %1122 = vmatpush1.bf16.msra.mxu0 0
        %1123 = vmatprep.subr.bf16.mxu0 0
        %1124 = vmatpush1.bf16.msra.mxu0 0
        %1125 = vmatprep.subr.bf16.mxu0 0
        %1126 = vmatpush1.bf16.msra.mxu0 0
        %1127 = vmatprep.subr.bf16.mxu0 0
        %1128 = vmatpush1.bf16.msra.mxu0 0
        %1129 = vmatprep.subr.bf16.mxu0 0
        %1130 = vmatpush1.bf16.msra.mxu0 0
        %1131 = vmatprep.subr.bf16.mxu0 0
        %1132 = vmatpush1.bf16.msra.mxu0 0
        %1133 = vmatprep.subr.bf16.mxu0 0
        %1134 = vmatpush1.bf16.msra.mxu0 0
        %1135 = vmatprep.subr.bf16.mxu0 0
        %1136 = vmatpush1.bf16.msra.mxu0 0
        %1137 = vmatprep.subr.bf16.mxu0 0
        %1138 = vmatpush1.bf16.msra.mxu0 0
        %1139 = vmatprep.subr.bf16.mxu0 0
        %1140 = vmatpush1.bf16.msra.mxu0 0
        %1141 = vmatprep.subr.bf16.mxu0 0
        %1142 = vmatpush1.bf16.msra.mxu0 0
        %1143 = vmatprep.mubr.bf16.mxu0 0
        %1144 = vmatmul.mubr.bf16.gmra.mrb[0].mxu0 %v1105
        %v1145 = vpop.f32.mrb[0].mxu0
        %v1146 = vadd.f32 0.0, %v1145
        %v1147 = vpop.f32.mrb[0].mxu0
        %v1148 = vpop.f32.mrb[0].mxu0
        %v1149 = vpop.f32.mrb[0].mxu0
        %1150 = vdwg.mxu0
        %v1152 = vsel %vm1079, %v1103, 0
        %v1155 = vsel %vm1107, %v981, 0
        %1157 = vmatprep.subr.bf16.mxu0 0
        %1158 = vmatpush1.bf16.msra.mxu0 %v1155
        %1159 = vmatprep.subr.bf16.mxu0 0
        %1160 = vmatpush1.bf16.msra.mxu0 0
        %1161 = vmatprep.subr.bf16.mxu0 0
        %1162 = vmatpush1.bf16.msra.mxu0 0
        %1163 = vmatprep.subr.bf16.mxu0 0
        %1164 = vmatpush1.bf16.msra.mxu0 0
        %1165 = vmatprep.subr.bf16.mxu0 0
        %1166 = vmatpush1.bf16.msra.mxu0 0
        %1167 = vmatprep.subr.bf16.mxu0 0
        %1168 = vmatpush1.bf16.msra.mxu0 0
        %1169 = vmatprep.subr.bf16.mxu0 0
        %1170 = vmatpush1.bf16.msra.mxu0 0
        %1171 = vmatprep.subr.bf16.mxu0 0
        %1172 = vmatpush1.bf16.msra.mxu0 0
        %1173 = vmatprep.subr.bf16.mxu0 0
        %1174 = vmatpush1.bf16.msra.mxu0 0
        %1175 = vmatprep.subr.bf16.mxu0 0
        %1176 = vmatpush1.bf16.msra.mxu0 0
        %1177 = vmatprep.subr.bf16.mxu0 0
        %1178 = vmatpush1.bf16.msra.mxu0 0
        %1179 = vmatprep.subr.bf16.mxu0 0
        %1180 = vmatpush1.bf16.msra.mxu0 0
        %1181 = vmatprep.subr.bf16.mxu0 0
        %1182 = vmatpush1.bf16.msra.mxu0 0
        %1183 = vmatprep.subr.bf16.mxu0 0
        %1184 = vmatpush1.bf16.msra.mxu0 0
        %1185 = vmatprep.subr.bf16.mxu0 0
        %1186 = vmatpush1.bf16.msra.mxu0 0
        %1187 = vmatprep.subr.bf16.mxu0 0
        %1188 = vmatpush1.bf16.msra.mxu0 0
        %1189 = vmatprep.mubr.bf16.mxu0 0
        %1190 = vmatmul.mubr.bf16.gmra.mrb[0].mxu0 %v1152
        %v1191 = vpop.f32.mrb[0].mxu0
        %v1192 = vadd.f32 0.0, %v1191
        %v1193 = vpop.f32.mrb[0].mxu0
        %v1194 = vpop.f32.mrb[0].mxu0
        %v1195 = vpop.f32.mrb[0].mxu0
        %1196 = vdwg.mxu0
        %1197 = vrot.lane.b32.xlu0 %v975, 96
        %v1198 = vpop.permute.xlu0 %1197
        %1199 = vrot.lane.b32.xlu0 %v975, 32
        %v1200 = vpop.permute.xlu0 %1199
        %v1202 = vsel %vm984, %v1198, 0
        %v1205 = vsel %vm984, %v1200, 0
        %1207 = vmatprep.subr.bf16.mxu0 0
        %1208 = vmatpush1.bf16.xpose.msra.mxu0 %v1205
        %1209 = vmatprep.subr.bf16.mxu0 0
        %1210 = vmatpush1.bf16.xpose.msra.mxu0 0
        %1211 = vmatprep.subr.bf16.mxu0 0
        %1212 = vmatpush1.bf16.xpose.msra.mxu0 0
        %1213 = vmatprep.subr.bf16.mxu0 0
        %1214 = vmatpush1.bf16.xpose.msra.mxu0 0
        %1215 = vmatprep.subr.bf16.mxu0 0
        %1216 = vmatpush1.bf16.xpose.msra.mxu0 0
        %1217 = vmatprep.subr.bf16.mxu0 0
        %1218 = vmatpush1.bf16.xpose.msra.mxu0 0
        %1219 = vmatprep.subr.bf16.mxu0 0
        %1220 = vmatpush1.bf16.xpose.msra.mxu0 0
        %1221 = vmatprep.subr.bf16.mxu0 0
        %1222 = vmatpush1.bf16.xpose.msra.mxu0 0
        %1223 = vmatprep.subr.bf16.mxu0 0
        %1224 = vmatpush1.bf16.xpose.msra.mxu0 0
        %1225 = vmatprep.subr.bf16.mxu0 0
        %1226 = vmatpush1.bf16.xpose.msra.mxu0 0
        %1227 = vmatprep.subr.bf16.mxu0 0
        %1228 = vmatpush1.bf16.xpose.msra.mxu0 0
        %1229 = vmatprep.subr.bf16.mxu0 0
        %1230 = vmatpush1.bf16.xpose.msra.mxu0 0
        %1231 = vmatprep.subr.bf16.mxu0 0
        %1232 = vmatpush1.bf16.xpose.msra.mxu0 0
        %1233 = vmatprep.subr.bf16.mxu0 0
        %1234 = vmatpush1.bf16.xpose.msra.mxu0 0
        %1235 = vmatprep.subr.bf16.mxu0 0
        %1236 = vmatpush1.bf16.xpose.msra.mxu0 0
        %1237 = vmatprep.subr.bf16.mxu0 0
        %1238 = vmatpush1.bf16.xpose.msra.mxu0 0
        %1239 = vmatprep.mubr.bf16.mxu0 0
        %1240 = vmatmul.mubr.bf16.gmra.mrb[0].mxu0 %v1202
        %v1241 = vpop.f32.mrb[0].mxu0
        %v1242 = vadd.f32 %v971, %v1241
        %v1243 = vpop.f32.mrb[0].mxu0
        %v1244 = vpop.f32.mrb[0].mxu0
        %v1245 = vpop.f32.mrb[0].mxu0
        %1246 = vdwg.mxu0
        %1247 = vrot.lane.b32.xlu0 %v976, 96
        %v1248 = vpop.permute.xlu0 %1247
        %1249 = vrot.lane.b32.xlu0 %v976, 32
        %v1250 = vpop.permute.xlu0 %1249
        %v1252 = vsel %vm984, %v1248, 0
        %v1255 = vsel %vm984, %v1250, 0
        %1257 = vmatprep.subr.bf16.mxu0 0
        %1258 = vmatpush1.bf16.xpose.msra.mxu0 %v1255
        %1259 = vmatprep.subr.bf16.mxu0 0
        %1260 = vmatpush1.bf16.xpose.msra.mxu0 0
        %1261 = vmatprep.subr.bf16.mxu0 0
        %1262 = vmatpush1.bf16.xpose.msra.mxu0 0
        %1263 = vmatprep.subr.bf16.mxu0 0
        %1264 = vmatpush1.bf16.xpose.msra.mxu0 0
        %1265 = vmatprep.subr.bf16.mxu0 0
        %1266 = vmatpush1.bf16.xpose.msra.mxu0 0
        %1267 = vmatprep.subr.bf16.mxu0 0
        %1268 = vmatpush1.bf16.xpose.msra.mxu0 0
        %1269 = vmatprep.subr.bf16.mxu0 0
        %1270 = vmatpush1.bf16.xpose.msra.mxu0 0
        %1271 = vmatprep.subr.bf16.mxu0 0
        %1272 = vmatpush1.bf16.xpose.msra.mxu0 0
        %1273 = vmatprep.subr.bf16.mxu0 0
        %1274 = vmatpush1.bf16.xpose.msra.mxu0 0
        %1275 = vmatprep.subr.bf16.mxu0 0
        %1276 = vmatpush1.bf16.xpose.msra.mxu0 0
        %1277 = vmatprep.subr.bf16.mxu0 0
        %1278 = vmatpush1.bf16.xpose.msra.mxu0 0
        %1279 = vmatprep.subr.bf16.mxu0 0
        %1280 = vmatpush1.bf16.xpose.msra.mxu0 0
        %1281 = vmatprep.subr.bf16.mxu0 0
        %1282 = vmatpush1.bf16.xpose.msra.mxu0 0
        %1283 = vmatprep.subr.bf16.mxu0 0
        %1284 = vmatpush1.bf16.xpose.msra.mxu0 0
        %1285 = vmatprep.subr.bf16.mxu0 0
        %1286 = vmatpush1.bf16.xpose.msra.mxu0 0
        %1287 = vmatprep.subr.bf16.mxu0 0
        %1288 = vmatpush1.bf16.xpose.msra.mxu0 0
        %1289 = vmatprep.mubr.bf16.mxu0 0
        %1290 = vmatmul.mubr.bf16.gmra.mrb[0].mxu0 %v1252
        %v1291 = vpop.f32.mrb[0].mxu0
        %v1292 = vadd.f32 %v971, %v1291
        %v1293 = vpop.f32.mrb[0].mxu0
        %v1294 = vpop.f32.mrb[0].mxu0
        %v1295 = vpop.f32.mrb[0].mxu0
        %1296 = vdwg.mxu0
        %v1297 = vsel %vm1079, %v1242, -inf
        %1298 = vmax.xlane.f32.xlu0 %v1297
        %v1299 = vpop.xlane.xlu0 %1298
        %v1300 = vsel %vm1079, %v1292, -inf
        %1301 = vmax.xlane.f32.xlu0 %v1300
        %v1302 = vpop.xlane.xlu0 %1301
        %v1303 = vsub.f32 %v1242, %v1299
        %v1304 = vsub.f32 %v1292, %v1302
        %v1305 = vmul.f32 %v1303, 1.442695
        %v1306 = vpow.pop %v1305
        %v1307 = vmul.f32 %v1304, 1.442695
        %v1308 = vpow.pop %v1307
        %v1309 = vsel %vm1079, %v1306, 0.0
        %1310 = vadd.xlane.f32.xlu0 %v1309
        %v1311 = vpop.xlane.xlu0 %1310
        %v1312 = vsel %vm1079, %v1308, 0.0
        %1313 = vadd.xlane.f32.xlu0 %v1312
        %v1314 = vpop.xlane.xlu0 %1313
        %v1315 = vrcp.pop %v1311
        %v1316 = vrcp.pop %v1314
        %v1317 = vmul.f32 %v1306, %v1315
        %v1318 = vmul.f32 %v1308, %v1316
        %v1319 = vpack.c.bf16 %v1317, %v1317
        %v1320 = vpack.c.bf16 %v1318, %v1318
        %1321 = vrot.lane.b32.xlu0 %v980, 96
        %v1322 = vpop.permute.xlu0 %1321
        %v1324 = vsel %vm1079, %v1319, 0
        %v1327 = vsel %vm1107, %v1322, 0
        %1329 = vmatprep.subr.bf16.mxu0 0
        %1330 = vmatpush1.bf16.msra.mxu0 %v1327
        %1331 = vmatprep.subr.bf16.mxu0 0
        %1332 = vmatpush1.bf16.msra.mxu0 0
        %1333 = vmatprep.subr.bf16.mxu0 0
        %1334 = vmatpush1.bf16.msra.mxu0 0
        %1335 = vmatprep.subr.bf16.mxu0 0
        %1336 = vmatpush1.bf16.msra.mxu0 0
        %1337 = vmatprep.subr.bf16.mxu0 0
        %1338 = vmatpush1.bf16.msra.mxu0 0
        %1339 = vmatprep.subr.bf16.mxu0 0
        %1340 = vmatpush1.bf16.msra.mxu0 0
        %1341 = vmatprep.subr.bf16.mxu0 0
        %1342 = vmatpush1.bf16.msra.mxu0 0
        %1343 = vmatprep.subr.bf16.mxu0 0
        %1344 = vmatpush1.bf16.msra.mxu0 0
        %1345 = vmatprep.subr.bf16.mxu0 0
        %1346 = vmatpush1.bf16.msra.mxu0 0
        %1347 = vmatprep.subr.bf16.mxu0 0
        %1348 = vmatpush1.bf16.msra.mxu0 0
        %1349 = vmatprep.subr.bf16.mxu0 0
        %1350 = vmatpush1.bf16.msra.mxu0 0
        %1351 = vmatprep.subr.bf16.mxu0 0
        %1352 = vmatpush1.bf16.msra.mxu0 0
        %1353 = vmatprep.subr.bf16.mxu0 0
        %1354 = vmatpush1.bf16.msra.mxu0 0
        %1355 = vmatprep.subr.bf16.mxu0 0
        %1356 = vmatpush1.bf16.msra.mxu0 0
        %1357 = vmatprep.subr.bf16.mxu0 0
        %1358 = vmatpush1.bf16.msra.mxu0 0
        %1359 = vmatprep.subr.bf16.mxu0 0
        %1360 = vmatpush1.bf16.msra.mxu0 0
        %1361 = vmatprep.mubr.bf16.mxu0 0
        %1362 = vmatmul.mubr.bf16.gmra.mrb[0].mxu0 %v1324
        %v1363 = vpop.f32.mrb[0].mxu0
        %v1364 = vadd.f32 0.0, %v1363
        %v1365 = vpop.f32.mrb[0].mxu0
        %v1366 = vpop.f32.mrb[0].mxu0
        %v1367 = vpop.f32.mrb[0].mxu0
        %1368 = vdwg.mxu0
        %1369 = vrot.lane.b32.xlu0 %v981, 96
        %v1370 = vpop.permute.xlu0 %1369
        %v1372 = vsel %vm1079, %v1320, 0
        %v1375 = vsel %vm1107, %v1370, 0
        %1377 = vmatprep.subr.bf16.mxu0 0
        %1378 = vmatpush1.bf16.msra.mxu0 %v1375
        %1379 = vmatprep.subr.bf16.mxu0 0
        %1380 = vmatpush1.bf16.msra.mxu0 0
        %1381 = vmatprep.subr.bf16.mxu0 0
        %1382 = vmatpush1.bf16.msra.mxu0 0
        %1383 = vmatprep.subr.bf16.mxu0 0
        %1384 = vmatpush1.bf16.msra.mxu0 0
        %1385 = vmatprep.subr.bf16.mxu0 0
        %1386 = vmatpush1.bf16.msra.mxu0 0
        %1387 = vmatprep.subr.bf16.mxu0 0
        %1388 = vmatpush1.bf16.msra.mxu0 0
        %1389 = vmatprep.subr.bf16.mxu0 0
        %1390 = vmatpush1.bf16.msra.mxu0 0
        %1391 = vmatprep.subr.bf16.mxu0 0
        %1392 = vmatpush1.bf16.msra.mxu0 0
        %1393 = vmatprep.subr.bf16.mxu0 0
        %1394 = vmatpush1.bf16.msra.mxu0 0
        %1395 = vmatprep.subr.bf16.mxu0 0
        %1396 = vmatpush1.bf16.msra.mxu0 0
        %1397 = vmatprep.subr.bf16.mxu0 0
        %1398 = vmatpush1.bf16.msra.mxu0 0
        %1399 = vmatprep.subr.bf16.mxu0 0
        %1400 = vmatpush1.bf16.msra.mxu0 0
        %1401 = vmatprep.subr.bf16.mxu0 0
        %1402 = vmatpush1.bf16.msra.mxu0 0
        %1403 = vmatprep.subr.bf16.mxu0 0
        %1404 = vmatpush1.bf16.msra.mxu0 0
        %1405 = vmatprep.subr.bf16.mxu0 0
        %1406 = vmatpush1.bf16.msra.mxu0 0
        %1407 = vmatprep.subr.bf16.mxu0 0
        %1408 = vmatpush1.bf16.msra.mxu0 0
        %1409 = vmatprep.mubr.bf16.mxu0 0
        %1410 = vmatmul.mubr.bf16.gmra.mrb[0].mxu0 %v1372
        %v1411 = vpop.f32.mrb[0].mxu0
        %v1412 = vadd.f32 0.0, %v1411
        %v1413 = vpop.f32.mrb[0].mxu0
        %v1414 = vpop.f32.mrb[0].mxu0
        %v1415 = vpop.f32.mrb[0].mxu0
        %1416 = vdwg.mxu0
        %1419 = vrot.lane.b32.xlu0 %v1364, 32
        %v1420 = vpop.permute.xlu0 %1419
        %1421 = vrot.lane.b32.xlu0 %v1412, 32
        %v1422 = vpop.permute.xlu0 %1421
        %v1425 = vsel %vm984, %v1146, %v1420
        %v1426 = vsel %vm984, %v1192, %v1422
        %v1427 = vpack.c.bf16 %v1426, %v1425
        %v1428 = vld [vmem:[%s774] sm:$0xf]
        %v1429 = vld [vmem:[%s774 + $0x4] sm:$0xf]
        %v1430 = vld [vmem:[%s774 + $0x8] sm:$0xf]
        %v1431 = vld [vmem:[%s774 + $0xc] sm:$0xf]
        %v1432 = vld [vmem:[%s774 + $0x10] sm:$0xf]
        %v1433 = vld [vmem:[%s774 + $0x14] sm:$0xf]
        %v1434 = vld [vmem:[%s774 + $0x18] sm:$0xf]
        %v1435 = vld [vmem:[%s774 + $0x1c] sm:$0xf]
        %v1436 = vld [vmem:[%s777] sm:$0x1]
        %v1438 = vlaneseq
        %v1439 = vshrl.u32 %v1438, 7
        %v1440 = vsub.s32 0, %v1439
        %v1441 = vrot.slane %v1436, %v1440
        %v1451 = vunpack.c.l.b16 %v1428
        %v1452 = vunpack.c.l.b16 %v1429
        %v1453 = vunpack.c.l.b16 %v1430
        %v1454 = vunpack.c.l.b16 %v1431
        %v1455 = vunpack.c.l.b16 %v1432
        %v1456 = vunpack.c.l.b16 %v1433
        %v1457 = vunpack.c.l.b16 %v1434
        %v1458 = vunpack.c.l.b16 %v1435
        %v1459 = vpack.c.b16 %v1452, %v1451
        %v1460 = vpack.c.b16 %v1454, %v1453
        %v1461 = vpack.c.b16 %v1456, %v1455
        %v1462 = vpack.c.b16 %v1458, %v1457
        %v1468 = vsel %vm818, %v1427, 0
        %1470 = vmatprep.subr.bf16.mxu0 0
        %1471 = vmatpush1.bf16.msra.mxu0 %v1459
        %1472 = vmatprep.subr.bf16.mxu0 0
        %1473 = vmatpush1.bf16.msra.mxu0 %v1460
        %1474 = vmatprep.subr.bf16.mxu0 0
        %1475 = vmatpush1.bf16.msra.mxu0 %v1461
        %1476 = vmatprep.subr.bf16.mxu0 0
        %1477 = vmatpush1.bf16.msra.mxu0 %v1462
        %1478 = vmatprep.subr.bf16.mxu0 0
        %1479 = vmatpush1.bf16.msra.mxu0 0
        %1480 = vmatprep.subr.bf16.mxu0 0
        %1481 = vmatpush1.bf16.msra.mxu0 0
        %1482 = vmatprep.subr.bf16.mxu0 0
        %1483 = vmatpush1.bf16.msra.mxu0 0
        %1484 = vmatprep.subr.bf16.mxu0 0
        %1485 = vmatpush1.bf16.msra.mxu0 0
        %1486 = vmatprep.subr.bf16.mxu0 0
        %1487 = vmatpush1.bf16.msra.mxu0 0
        %1488 = vmatprep.subr.bf16.mxu0 0
        %1489 = vmatpush1.bf16.msra.mxu0 0
        %1490 = vmatprep.subr.bf16.mxu0 0
        %1491 = vmatpush1.bf16.msra.mxu0 0
        %1492 = vmatprep.subr.bf16.mxu0 0
        %1493 = vmatpush1.bf16.msra.mxu0 0
        %1494 = vmatprep.subr.bf16.mxu0 0
        %1495 = vmatpush1.bf16.msra.mxu0 0
        %1496 = vmatprep.subr.bf16.mxu0 0
        %1497 = vmatpush1.bf16.msra.mxu0 0
        %1498 = vmatprep.subr.bf16.mxu0 0
        %1499 = vmatpush1.bf16.msra.mxu0 0
        %1500 = vmatprep.subr.bf16.mxu0 0
        %1501 = vmatpush1.bf16.msra.mxu0 0
        %1502 = vmatprep.mubr.bf16.mxu0 0
        %1503 = vmatmul.mubr.bf16.gmra.mrb[0].mxu0 %v1468
        %v1504 = vpop.f32.mrb[0].mxu0
        %v1505 = vadd.f32 %v1441, %v1504
        %v1506 = vpop.f32.mrb[0].mxu0
        %v1507 = vpop.f32.mrb[0].mxu0
        %v1508 = vadd.f32 %v1441, %v1507
        %v1509 = vpop.f32.mrb[0].mxu0
        %1510 = vdwg.mxu0
        %v1511 = vadd.f32 %v814, %v1505
        %v1512 = vadd.f32 %v815, %v1508
        %1513 = vst.msk [vmem:[#allocation2] sm:$0xff] %vm818, %v1511
        %1514 = vst.msk [vmem:[#allocation2 + $0x8] sm:$0xff] %vm818, %v1512
        %v1515 = vld [vmem:[#allocation2] sm:$0xff]
        %v1516 = vld [vmem:[#allocation2 + $0x8] sm:$0xff]
        %v1517 = vld [vmem:[%s780] sm:$0x1]
        %v1518 = vld [vmem:[%s783] sm:$0x1]
        %v1519 = vsel %vm818, %v1515, 0.0
        %1520 = vadd.xlane.f32.xlu0 %v1519
        %v1521 = vpop.xlane.xlu0 %1520
        %v1522 = vsel %vm818, %v1516, 0.0
        %1523 = vadd.xlane.f32.xlu0 %v1522
        %v1524 = vpop.xlane.xlu0 %1523
        %v1525 = vmul.f32 %v1521, %v825
        %v1526 = vmul.f32 %v1524, %v825
        %v1527 = vsub.f32 %v1515, %v1525
        %v1528 = vsub.f32 %v1516, %v1526
        %v1529 = vmul.f32 %v1527, %v1527
        %v1530 = vmul.f32 %v1528, %v1528
        %v1531 = vsel %vm818, %v1529, 0.0
        %1532 = vadd.xlane.f32.xlu0 %v1531
        %v1533 = vpop.xlane.xlu0 %1532
        %v1534 = vsel %vm818, %v1530, 0.0
        %1535 = vadd.xlane.f32.xlu0 %v1534
        %v1536 = vpop.xlane.xlu0 %1535
        %v1537 = vmul.f32 %v1533, %v825
        %v1538 = vmul.f32 %v1536, %v825
        %v1539 = vadd.f32 %v1537, 1e-05
        %v1540 = vadd.f32 %v1538, 1e-05
        %v1541 = vrsqrt.pop %v1539
        %v1542 = vrsqrt.pop %v1540
        %v1543 = vmul.f32 %v1527, %v1541
        %v1544 = vmul.f32 %v1528, %v1542
        %v1546 = vlaneseq
        %v1547 = vshrl.u32 %v1546, 7
        %v1548 = vsub.s32 0, %v1547
        %v1549 = vrot.slane %v1517, %v1548
        %v1551 = vmul.f32 %v1543, %v1549
        %v1552 = vmul.f32 %v1544, %v1549
        %v1554 = vlaneseq
        %v1555 = vshrl.u32 %v1554, 7
        %v1556 = vsub.s32 0, %v1555
        %v1557 = vrot.slane %v1518, %v1556
        %v1559 = vadd.f32 %v1551, %v1557
        %v1560 = vadd.f32 %v1552, %v1557
        %v1561 = vpack.c.bf16 %v1560, %v1559
        %v1562 = vld [vmem:[%s788] sm:$0xff]
        %v1563 = vld [vmem:[%s788 + $0x8] sm:$0xff]
        %v1564 = vld [vmem:[%s788 + $0x10] sm:$0xff]
        %v1565 = vld [vmem:[%s788 + $0x18] sm:$0xff]
        %v1566 = vld [vmem:[%s788 + $0x20] sm:$0xff]
        %v1567 = vld [vmem:[%s788 + $0x28] sm:$0xff]
        %v1568 = vld [vmem:[%s788 + $0x30] sm:$0xff]
        %v1569 = vld [vmem:[%s788 + $0x38] sm:$0xff]
        %v1570 = vld [vmem:[%s792] sm:$0x3]
        %v1572 = vlaneseq
        %v1573 = vshrl.u32 %v1572, 7
        %v1574 = vsub.s32 0, %v1573
        %v1575 = vrot.slane %v1570, %v1574
        %v1576 = vlaneseq
        %v1577 = vshrl.u32 %v1576, 7
        %v1578 = vsub.s32 1, %v1577
        %v1579 = vrot.slane %v1570, %v1578
        %v1590 = vunpack.c.l.b16 %v1562
        %v1591 = vunpack.c.h.b16 %v1562
        %v1592 = vunpack.c.l.b16 %v1563
        %v1593 = vunpack.c.h.b16 %v1563
        %v1594 = vunpack.c.l.b16 %v1564
        %v1595 = vunpack.c.h.b16 %v1564
        %v1596 = vunpack.c.l.b16 %v1565
        %v1597 = vunpack.c.h.b16 %v1565
        %v1598 = vunpack.c.l.b16 %v1566
        %v1599 = vunpack.c.h.b16 %v1566
        %v1600 = vunpack.c.l.b16 %v1567
        %v1601 = vunpack.c.h.b16 %v1567
        %v1602 = vunpack.c.l.b16 %v1568
        %v1603 = vunpack.c.h.b16 %v1568
        %v1604 = vunpack.c.l.b16 %v1569
        %v1605 = vunpack.c.h.b16 %v1569
        %v1606 = vpack.c.b16 %v1592, %v1590
        %v1607 = vpack.c.b16 %v1593, %v1591
        %v1608 = vpack.c.b16 %v1596, %v1594
        %v1609 = vpack.c.b16 %v1597, %v1595
        %v1610 = vpack.c.b16 %v1600, %v1598
        %v1611 = vpack.c.b16 %v1601, %v1599
        %v1612 = vpack.c.b16 %v1604, %v1602
        %v1613 = vpack.c.b16 %v1605, %v1603
        %v1623 = vsel %vm818, %v1561, 0
        %1625 = vmatprep.subr.bf16.mxu0 %v1607
        %1626 = vmatpush1.bf16.msra.mxu0 %v1606
        %1627 = vmatprep.subr.bf16.mxu0 %v1609
        %1628 = vmatpush1.bf16.msra.mxu0 %v1608
        %1629 = vmatprep.subr.bf16.mxu0 %v1611
        %1630 = vmatpush1.bf16.msra.mxu0 %v1610
        %1631 = vmatprep.subr.bf16.mxu0 %v1613
        %1632 = vmatpush1.bf16.msra.mxu0 %v1612
        %1633 = vmatprep.subr.bf16.mxu0 0
        %1634 = vmatpush1.bf16.msra.mxu0 0
        %1635 = vmatprep.subr.bf16.mxu0 0
        %1636 = vmatpush1.bf16.msra.mxu0 0
        %1637 = vmatprep.subr.bf16.mxu0 0
        %1638 = vmatpush1.bf16.msra.mxu0 0
        %1639 = vmatprep.subr.bf16.mxu0 0
        %1640 = vmatpush1.bf16.msra.mxu0 0
        %1641 = vmatprep.subr.bf16.mxu0 0
        %1642 = vmatpush1.bf16.msra.mxu0 0
        %1643 = vmatprep.subr.bf16.mxu0 0
        %1644 = vmatpush1.bf16.msra.mxu0 0
        %1645 = vmatprep.subr.bf16.mxu0 0
        %1646 = vmatpush1.bf16.msra.mxu0 0
        %1647 = vmatprep.subr.bf16.mxu0 0
        %1648 = vmatpush1.bf16.msra.mxu0 0
        %1649 = vmatprep.subr.bf16.mxu0 0
        %1650 = vmatpush1.bf16.msra.mxu0 0
        %1651 = vmatprep.subr.bf16.mxu0 0
        %1652 = vmatpush1.bf16.msra.mxu0 0
        %1653 = vmatprep.subr.bf16.mxu0 0
        %1654 = vmatpush1.bf16.msra.mxu0 0
        %1655 = vmatprep.subr.bf16.mxu0 0
        %1656 = vmatpush1.bf16.msra.mxu0 0
        %1657 = vmatprep.mubr.bf16.mxu0 0
        %1658 = vmatmul.mubr.bf16.gmra.mrb[0].mxu0 %v1623
        %v1659 = vpop.f32.mrb[0].mxu0
        %v1660 = vadd.f32 %v1575, %v1659
        %v1661 = vpop.f32.mrb[0].mxu0
        %v1662 = vadd.f32 %v1579, %v1661
        %v1663 = vpop.f32.mrb[0].mxu0
        %v1664 = vadd.f32 %v1575, %v1663
        %v1665 = vpop.f32.mrb[0].mxu0
        %v1666 = vadd.f32 %v1579, %v1665
        %1667 = vdwg.mxu0
        %v1668 = vmul.f32 %v1660, 1.702
        %v1669 = vmul.f32 %v1662, 1.702
        %v1670 = vmul.f32 %v1664, 1.702
        %v1671 = vmul.f32 %v1666, 1.702
        %v1672 = vxor.u32 %v1668, 2147483648
        %v1673 = vxor.u32 %v1669, 2147483648
        %v1674 = vxor.u32 %v1670, 2147483648
        %v1675 = vxor.u32 %v1671, 2147483648
        %v1676 = vmul.f32 %v1672, 1.442695
        %v1677 = vpow.pop %v1676
        %v1678 = vmul.f32 %v1673, 1.442695
        %v1679 = vpow.pop %v1678
        %v1680 = vmul.f32 %v1674, 1.442695
        %v1681 = vpow.pop %v1680
        %v1682 = vmul.f32 %v1675, 1.442695
        %v1683 = vpow.pop %v1682
        %v1684 = vadd.f32 %v1677, 1.0
        %v1685 = vadd.f32 %v1679, 1.0
        %v1686 = vadd.f32 %v1681, 1.0
        %v1687 = vadd.f32 %v1683, 1.0
        %v1688 = vrcp.pop %v1684
        %v1689 = vmul.f32 1.0, %v1688
        %v1690 = vrcp.pop %v1685
        %v1691 = vmul.f32 1.0, %v1690
        %v1692 = vrcp.pop %v1686
        %v1693 = vmul.f32 1.0, %v1692
        %v1694 = vrcp.pop %v1687
        %v1695 = vmul.f32 1.0, %v1694
        %v1696 = vmul.f32 %v1660, %v1689
        %v1697 = vmul.f32 %v1662, %v1691
        %v1698 = vmul.f32 %v1664, %v1693
        %v1699 = vmul.f32 %v1666, %v1695
        %v1700 = vpack.c.bf16 %v1698, %v1696
        %v1701 = vpack.c.bf16 %v1699, %v1697
        %v1702 = vld [vmem:[%s797] sm:$0xf]
        %v1703 = vld [vmem:[%s797 + $0x4] sm:$0xf]
        %v1704 = vld [vmem:[%s797 + $0x8] sm:$0xf]
        %v1705 = vld [vmem:[%s797 + $0xc] sm:$0xf]
        %v1706 = vld [vmem:[%s797 + $0x10] sm:$0xf]
        %v1707 = vld [vmem:[%s797 + $0x14] sm:$0xf]
        %v1708 = vld [vmem:[%s797 + $0x18] sm:$0xf]
        %v1709 = vld [vmem:[%s797 + $0x1c] sm:$0xf]
        %v1710 = vld [vmem:[%s797 + $0x20] sm:$0xf]
        %v1711 = vld [vmem:[%s797 + $0x24] sm:$0xf]
        %v1712 = vld [vmem:[%s797 + $0x28] sm:$0xf]
        %v1713 = vld [vmem:[%s797 + $0x2c] sm:$0xf]
        %v1714 = vld [vmem:[%s797 + $0x30] sm:$0xf]
        %v1715 = vld [vmem:[%s797 + $0x34] sm:$0xf]
        %v1716 = vld [vmem:[%s797 + $0x38] sm:$0xf]
        %v1717 = vld [vmem:[%s797 + $0x3c] sm:$0xf]
        %v1718 = vld [vmem:[%s797 + $0x40] sm:$0xf]
        %v1719 = vld [vmem:[%s797 + $0x44] sm:$0xf]
        %v1720 = vld [vmem:[%s797 + $0x48] sm:$0xf]
        %v1721 = vld [vmem:[%s797 + $0x4c] sm:$0xf]
        %v1722 = vld [vmem:[%s797 + $0x50] sm:$0xf]
        %v1723 = vld [vmem:[%s797 + $0x54] sm:$0xf]
        %v1724 = vld [vmem:[%s797 + $0x58] sm:$0xf]
        %v1725 = vld [vmem:[%s797 + $0x5c] sm:$0xf]
        %v1726 = vld [vmem:[%s797 + $0x60] sm:$0xf]
        %v1727 = vld [vmem:[%s797 + $0x64] sm:$0xf]
        %v1728 = vld [vmem:[%s797 + $0x68] sm:$0xf]
        %v1729 = vld [vmem:[%s797 + $0x6c] sm:$0xf]
        %v1730 = vld [vmem:[%s797 + $0x70] sm:$0xf]
        %v1731 = vld [vmem:[%s797 + $0x74] sm:$0xf]
        %v1732 = vld [vmem:[%s797 + $0x78] sm:$0xf]
        %v1733 = vld [vmem:[%s797 + $0x7c] sm:$0xf]
        %v1734 = vld [vmem:[%s800] sm:$0x1]
        %v1736 = vlaneseq
        %v1737 = vshrl.u32 %v1736, 7
        %v1738 = vsub.s32 0, %v1737
        %v1739 = vrot.slane %v1734, %v1738
        %v1773 = vunpack.c.l.b16 %v1702
        %v1774 = vunpack.c.l.b16 %v1703
        %v1775 = vunpack.c.l.b16 %v1704
        %v1776 = vunpack.c.l.b16 %v1705
        %v1777 = vunpack.c.l.b16 %v1706
        %v1778 = vunpack.c.l.b16 %v1707
        %v1779 = vunpack.c.l.b16 %v1708
        %v1780 = vunpack.c.l.b16 %v1709
        %v1781 = vunpack.c.l.b16 %v1710
        %v1782 = vunpack.c.l.b16 %v1711
        %v1783 = vunpack.c.l.b16 %v1712
        %v1784 = vunpack.c.l.b16 %v1713
        %v1785 = vunpack.c.l.b16 %v1714
        %v1786 = vunpack.c.l.b16 %v1715
        %v1787 = vunpack.c.l.b16 %v1716
        %v1788 = vunpack.c.l.b16 %v1717
        %v1789 = vunpack.c.l.b16 %v1718
        %v1790 = vunpack.c.l.b16 %v1719
        %v1791 = vunpack.c.l.b16 %v1720
        %v1792 = vunpack.c.l.b16 %v1721
        %v1793 = vunpack.c.l.b16 %v1722
        %v1794 = vunpack.c.l.b16 %v1723
        %v1795 = vunpack.c.l.b16 %v1724
        %v1796 = vunpack.c.l.b16 %v1725
        %v1797 = vunpack.c.l.b16 %v1726
        %v1798 = vunpack.c.l.b16 %v1727
        %v1799 = vunpack.c.l.b16 %v1728
        %v1800 = vunpack.c.l.b16 %v1729
        %v1801 = vunpack.c.l.b16 %v1730
        %v1802 = vunpack.c.l.b16 %v1731
        %v1803 = vunpack.c.l.b16 %v1732
        %v1804 = vunpack.c.l.b16 %v1733
        %v1805 = vpack.c.b16 %v1774, %v1773
        %v1806 = vpack.c.b16 %v1776, %v1775
        %v1807 = vpack.c.b16 %v1778, %v1777
        %v1808 = vpack.c.b16 %v1780, %v1779
        %v1809 = vpack.c.b16 %v1782, %v1781
        %v1810 = vpack.c.b16 %v1784, %v1783
        %v1811 = vpack.c.b16 %v1786, %v1785
        %v1812 = vpack.c.b16 %v1788, %v1787
        %v1813 = vpack.c.b16 %v1790, %v1789
        %v1814 = vpack.c.b16 %v1792, %v1791
        %v1815 = vpack.c.b16 %v1794, %v1793
        %v1816 = vpack.c.b16 %v1796, %v1795
        %v1817 = vpack.c.b16 %v1798, %v1797
        %v1818 = vpack.c.b16 %v1800, %v1799
        %v1819 = vpack.c.b16 %v1802, %v1801
        %v1820 = vpack.c.b16 %v1804, %v1803
        %1837 = vmatprep.subr.bf16.mxu0 0
        %1838 = vmatpush1.bf16.msra.mxu0 %v1805
        %1839 = vmatprep.subr.bf16.mxu0 0
        %1840 = vmatpush1.bf16.msra.mxu0 %v1806
        %1841 = vmatprep.subr.bf16.mxu0 0
        %1842 = vmatpush1.bf16.msra.mxu0 %v1807
        %1843 = vmatprep.subr.bf16.mxu0 0
        %1844 = vmatpush1.bf16.msra.mxu0 %v1808
        %1845 = vmatprep.subr.bf16.mxu0 0
        %1846 = vmatpush1.bf16.msra.mxu0 %v1809
        %1847 = vmatprep.subr.bf16.mxu0 0
        %1848 = vmatpush1.bf16.msra.mxu0 %v1810
        %1849 = vmatprep.subr.bf16.mxu0 0
        %1850 = vmatpush1.bf16.msra.mxu0 %v1811
        %1851 = vmatprep.subr.bf16.mxu0 0
        %1852 = vmatpush1.bf16.msra.mxu0 %v1812
        %1853 = vmatprep.subr.bf16.mxu0 0
        %1854 = vmatpush1.bf16.msra.mxu0 %v1813
        %1855 = vmatprep.subr.bf16.mxu0 0
        %1856 = vmatpush1.bf16.msra.mxu0 %v1814
        %1857 = vmatprep.subr.bf16.mxu0 0
        %1858 = vmatpush1.bf16.msra.mxu0 %v1815
        %1859 = vmatprep.subr.bf16.mxu0 0
        %1860 = vmatpush1.bf16.msra.mxu0 %v1816
        %1861 = vmatprep.subr.bf16.mxu0 0
        %1862 = vmatpush1.bf16.msra.mxu0 %v1817
        %1863 = vmatprep.subr.bf16.mxu0 0
        %1864 = vmatpush1.bf16.msra.mxu0 %v1818
        %1865 = vmatprep.subr.bf16.mxu0 0
        %1866 = vmatpush1.bf16.msra.mxu0 %v1819
        %1867 = vmatprep.subr.bf16.mxu0 0
        %1868 = vmatpush1.bf16.msra.mxu0 %v1820
        %1869 = vmatprep.mubr.bf16.mxu0 %v1701
        %1870 = vmatmul.mubr.bf16.gmra.mrb[0].mxu0 %v1700
        %v1871 = vpop.f32.mrb[0].mxu0
        %v1872 = vadd.f32 %v1739, %v1871
        %v1873 = vpop.f32.mrb[0].mxu0
        %v1874 = vpop.f32.mrb[0].mxu0
        %v1875 = vadd.f32 %v1739, %v1874
        %v1876 = vpop.f32.mrb[0].mxu0
        %1877 = vdwg.mxu0
        %v1878 = vadd.f32 %v1515, %v1872
        %v1879 = vadd.f32 %v1516, %v1875
        %1880 = vst.msk [vmem:[#allocation2] sm:$0xff] %vm818, %v1878
        %1881 = vst.msk [vmem:[#allocation2 + $0x8] sm:$0xff] %vm818, %v1879
        %p1882 = scmp.eq.s32.totalorder %s35, 1
        // Predicated region
        $region97: #{tpu_custom_call.1} parent=91 // pred_check
          %p1883 = pneg %p1882
        $region98: #{tpu_custom_call.1} parent=91 // pred_check_branch
          %1885 = sbr.rel (%p1883) target = $region100
        $region99: #{tpu_custom_call.1} parent=91 // pred_region
          %v1886 = vld [vmem:[#allocation2] sm:$0xff]
          %v1887 = vld [vmem:[#allocation2 + $0x8] sm:$0xff]
          %v1888 = vld [vmem:[%s753] sm:$0xff]
          %v1889 = vld [vmem:[%s753 + $0x8] sm:$0xff]
          %1891 = vset.pattern.permute.xlu0 0
          %1892 = vperm.xlu0 %1891, %v1888
          %v1893 = vpop.permute.xlu0 %1892
          %1896 = vset.pattern.permute.xlu0 0
          %1897 = vperm.xlu0 %1896, %v1889
          %v1898 = vpop.permute.xlu0 %1897
          %v1900 = vmul.f32 %v1886, %v1893
          %v1901 = vmul.f32 %v1887, %v1898
          %v1902 = vsel %vm818, %v1900, 0.0
          %v1903 = vrot.slane %v1902, 4
          %v1904 = vadd.f32 %v1902, %v1903
          %v1905 = vrot.slane %v1904, 2
          %v1906 = vadd.f32 %v1904, %v1905
          %v1907 = vrot.slane %v1906, 1
          %v1908 = vadd.f32 %v1906, %v1907
          %v1909 = vsel %vm818, %v1901, 0.0
          %v1910 = vrot.slane %v1909, 4
          %v1911 = vadd.f32 %v1909, %v1910
          %v1912 = vrot.slane %v1911, 2
          %v1913 = vadd.f32 %v1911, %v1912
          %v1914 = vrot.slane %v1913, 1
          %v1915 = vadd.f32 %v1913, %v1914
          %v1916 = vld [vmem:[%s15] sm:$0x1]
          %v1917 = vld [vmem:[%s16] sm:$0x1]
          %vm1920 = vcmask 1041409
          %v1921 = vsel %vm1920, %v1915, %v1908
          %vm1923 = vcmask 517120
          %v1924 = vsel %vm1923, %v1921, 0.0
          %1925 = vadd.xlane.f32.xlu0 %v1924
          %v1926 = vpop.xlane.xlu0 %1925
          %v1927 = vmul.f32 %v1926, %v825
          %v1929 = vrot.slane %v1927, 1
          %v1932 = vsub.f32 %v1908, %v1927
          %v1933 = vsub.f32 %v1915, %v1929
          %v1934 = vmul.f32 %v1932, %v1932
          %v1935 = vmul.f32 %v1933, %v1933
          %v1938 = vrot.slane %v1935, 7
          %v1939 = vsel %vm1920, %v1938, %v1934
          %v1941 = vsel %vm1923, %v1939, 0.0
          %1942 = vadd.xlane.f32.xlu0 %v1941
          %v1943 = vpop.xlane.xlu0 %1942
          %v1944 = vmul.f32 %v1943, %v825
          %v1945 = vadd.f32 %v1944, 1e-05
          %v1946 = vrsqrt.pop %v1945
          %v1948 = vrot.slane %v1946, 1
          %v1951 = vmul.f32 %v1932, %v1946
          %v1952 = vmul.f32 %v1933, %v1948
          %v1954 = vlaneseq
          %v1955 = vshrl.u32 %v1954, 7
          %v1956 = vsub.s32 0, %v1955
          %v1957 = vrot.slane %v1916, %v1956
          %v1959 = vmul.f32 %v1951, %v1957
          %v1960 = vmul.f32 %v1952, %v1957
          %v1962 = vlaneseq
          %v1963 = vshrl.u32 %v1962, 7
          %v1964 = vsub.s32 0, %v1963
          %v1965 = vrot.slane %v1917, %v1964
          %v1967 = vadd.f32 %v1959, %v1965
          %v1968 = vadd.f32 %v1960, %v1965
          %v1969 = vpack.c.bf16 %v1967, %v1967
          %v1970 = vpack.c.bf16 %v1968, %v1968
          %v1971 = vld [vmem:[%s17] sm:$0xf]
          %v1972 = vld [vmem:[%s17 + $0x4] sm:$0xf]
          %v1973 = vld [vmem:[%s17 + $0x8] sm:$0xf]
          %v1974 = vld [vmem:[%s17 + $0xc] sm:$0xf]
          %v1975 = vld [vmem:[%s17 + $0x10] sm:$0xf]
          %v1976 = vld [vmem:[%s17 + $0x14] sm:$0xf]
          %v1977 = vld [vmem:[%s17 + $0x18] sm:$0xf]
          %v1978 = vld [vmem:[%s17 + $0x1c] sm:$0xf]
          %v1981 = vunpack.c.l.b16 %v1969
          %v1982 = vunpack.c.l.b16 %v1970
          %v1983 = vrot.slane %v1982, 7
          %v1984 = vsel %vm1920, %v1983, %v1981
          %v1985 = vpack.c.b16 %v1984, %v1984
          %v1994 = vunpack.c.l.b16 %v1971
          %v1995 = vunpack.c.l.b16 %v1972
          %v1996 = vunpack.c.l.b16 %v1973
          %v1997 = vunpack.c.l.b16 %v1974
          %v1998 = vunpack.c.l.b16 %v1975
          %v1999 = vunpack.c.l.b16 %v1976
          %v2000 = vunpack.c.l.b16 %v1977
          %v2001 = vunpack.c.l.b16 %v1978
          %v2002 = vpack.c.b16 %v1995, %v1994
          %v2003 = vpack.c.b16 %v1997, %v1996
          %v2004 = vpack.c.b16 %v1999, %v1998
          %v2005 = vpack.c.b16 %v2001, %v2000
          %v2011 = vsel %vm818, %v1985, 0
          %2013 = vmatprep.subr.bf16.mxu0 0
          %2014 = vmatpush1.bf16.msra.mxu0 %v2002
          %2015 = vmatprep.subr.bf16.mxu0 0
          %2016 = vmatpush1.bf16.msra.mxu0 %v2003
          %2017 = vmatprep.subr.bf16.mxu0 0
          %2018 = vmatpush1.bf16.msra.mxu0 %v2004
          %2019 = vmatprep.subr.bf16.mxu0 0
          %2020 = vmatpush1.bf16.msra.mxu0 %v2005
          %2021 = vmatprep.subr.bf16.mxu0 0
          %2022 = vmatpush1.bf16.msra.mxu0 0
          %2023 = vmatprep.subr.bf16.mxu0 0
          %2024 = vmatpush1.bf16.msra.mxu0 0
          %2025 = vmatprep.subr.bf16.mxu0 0
          %2026 = vmatpush1.bf16.msra.mxu0 0
          %2027 = vmatprep.subr.bf16.mxu0 0
          %2028 = vmatpush1.bf16.msra.mxu0 0
          %2029 = vmatprep.subr.bf16.mxu0 0
          %2030 = vmatpush1.bf16.msra.mxu0 0
          %2031 = vmatprep.subr.bf16.mxu0 0
          %2032 = vmatpush1.bf16.msra.mxu0 0
          %2033 = vmatprep.subr.bf16.mxu0 0
          %2034 = vmatpush1.bf16.msra.mxu0 0
          %2035 = vmatprep.subr.bf16.mxu0 0
          %2036 = vmatpush1.bf16.msra.mxu0 0
          %2037 = vmatprep.subr.bf16.mxu0 0
          %2038 = vmatpush1.bf16.msra.mxu0 0
          %2039 = vmatprep.subr.bf16.mxu0 0
          %2040 = vmatpush1.bf16.msra.mxu0 0
          %2041 = vmatprep.subr.bf16.mxu0 0
          %2042 = vmatpush1.bf16.msra.mxu0 0
          %2043 = vmatprep.subr.bf16.mxu0 0
          %2044 = vmatpush1.bf16.msra.mxu0 0
          %2045 = vmatprep.mubr.bf16.mxu0 0
          %2046 = vmatmul.mubr.bf16.gmra.mrb[0].mxu0 %v2011
          %v2047 = vpop.f32.mrb[0].mxu0
          %v2048 = vadd.f32 0.0, %v2047
          %v2049 = vpop.f32.mrb[0].mxu0
          %v2050 = vpop.f32.mrb[0].mxu0
          %v2051 = vpop.f32.mrb[0].mxu0
          %2052 = vdwg.mxu0
          %v2055 = vunpack.c.l.s4 1966171168
          %v2056 = vunpack.c.0.s8 %v2055
          %v2057 = vlaneseq
          %v2058 = vshrl.u32 %v2057, 7
          %v2059 = vsub.s32 %v2056, %v2058
          %v2060 = vrot.slane %v2048, %v2059
          %v2061 = vcombine.high %v2060, %v2060
          %v2063 = vunpack.c.l.s4 1966171168
          %v2064 = vunpack.c.0.s8 %v2063
          %v2065 = vlaneseq
          %v2066 = vshrl.u32 %v2065, 7
          %v2067 = vsub.s32 %v2064, %v2066
          %v2068 = vrot.slane %v2060, %v2067
          %v2070 = vunpack.c.l.s4 1966171168
          %v2071 = vunpack.c.0.s8 %v2070
          %v2072 = vlaneseq
          %v2073 = vshrl.u32 %v2072, 7
          %v2074 = vsub.s32 %v2071, %v2073
          %v2075 = vrot.slane %v2061, %v2074
          %2078 = vst [vmem:[#allocation3] sm:$0x1] %v2068
          %2079 = vst [vmem:[#allocation3 + $0x1] sm:$0x1] %v2075
        $region100: #{tpu_custom_call.1} parent=91 // pred_fallthru
          _
        // Predicated region
        $region101: #{tpu_custom_call.1} parent=91 // pred_check
          %p2080 = pneg %p508
        $region102: #{tpu_custom_call.1} parent=91 // pred_check_branch
          %2082 = sbr.rel (%p2080) target = $region104
        $region103: #{tpu_custom_call.1} parent=91 // pred_region
          %s2083 = smul.u32 2, %s34
          %s2085 = ssub.s32 32, 32
          %2086 = vsyncadd [#allocation4], %s2085
          %s2087 = smul.addr %s2083, 16
          %s2088 = scalar_lea.hbm %s18, %s2087
          %s2089 = sshll.u32 [#allocation3], 4
          %s2090 = int_to_ptr.vmem [resolvable:$true] %s2089
          %2095 = dma.vmem_to_hbm [thread:$0]  %s2090, 32, %s2088, [#allocation4], 16, 16, 1
        $region104: #{tpu_custom_call.1} parent=91 // pred_fallthru
          _
        // Predicated region
        $region105: #{tpu_custom_call.1} parent=91 // pred_check
          %p2096 = pneg %p508
        $region106: #{tpu_custom_call.1} parent=91 // pred_check_branch
          %2098 = sbr.rel (%p2096) target = $region108
        $region107: #{tpu_custom_call.1} parent=91 // pred_region
          %2099 = dma.done [#allocation4], 32
        $region108: #{tpu_custom_call.1} parent=91 // pred_fallthru
          _
      $region92: #{tpu_custom_call.1} parent=5 // pred_fallthru
        _
      %p2100 = scmp.le.s32.totalorder 2, %s25
      // Predicated region
      $region109: #{tpu_custom_call.1} parent=5 // pred_check
        %p2101 = pneg %p2100
      $region110: #{tpu_custom_call.1} parent=5 // pred_check_branch
        %2103 = sbr.rel (%p2101) target = $region112
      $region111: #{tpu_custom_call.1} parent=5 // pred_region
        %s2104 = ssub.s32 %s25, 2
      $region112: #{tpu_custom_call.1} parent=5 // pred_fallthru
        _
    $region6: #{tpu_custom_call.1} parent=1 // loop_footer
      %s29 = sadd.s32 1, %s25
    $region7: #{tpu_custom_call.1} parent=1 // loop_footer_branch
      %24 = sbr.rel target = $region3
    $region8: #{tpu_custom_call.1} parent=1 // loop_exit
      _
    %2105 = vsyncpa [#allocation4], 1
    %s2106 = scalar_lea.sflag [#allocation4], 1
    %2107 = vsyncpa %s2106, 1

</llo_original>
